<compile_context>
chip_gen: v5e
topology: v5e:2x2
jax: 0.10.0
libtpu: 0.0.40
codegen_flags: <defaults>
</compile_context>

<pallas_src>
import functools
import numpy as np

import jax
import jax.numpy as jnp
from jax import lax
from jax.experimental import pallas as pl
from jax.experimental.pallas import tpu as pltpu

# ------------------------- model hyper-parameters ---------------------------
B = 2            # batch of graphs
N_NODES = 6      # args.dataset.max_n
HIDDEN = 32      # model.hidden_size
HEADS = 2        # encoder/decoder heads
FH = HIDDEN // HEADS
K_MIX = 4        # num_mix_comp
ENC_LAYERS = 2
DEC_LAYERS = 2
NEG_SLOPE = 0.2  # GATConv LeakyReLU slope
NEG_INF = -1e9

# ---------------- padded per-graph sizes (sublane multiples of 8) -----------
NT_P = 8                                # nodes / graph, padded 6 -> 8
E_G = N_NODES * (N_NODES - 1) // 2      # 15 edge rows / graph
E_P = 16                                # padded edge rows
S_G = N_NODES - 1                       # 5 subgraphs / graph
S_P = 8                                 # padded subgraph rows
F_P = HIDDEN                            # padded input feature dim 6 -> 32
W_EXT = HIDDEN + 2 * HEADS              # folded projection width: [z | s_dst | s_src]
H3 = 3 * HIDDEN                         # fused output-head width
L_GAT = ENC_LAYERS + DEC_LAYERS


# ----------------------------- fused Pallas kernel --------------------------
def fused_forward_kernel(nf_ref, aenc_ref, adec_ref, gall_ref, plab_ref,
                         oh_ref, invc_ref, w_ref, b_ref, hw_ref, hb_ref,
                         loss_ref, *, inv_batch):
    """One graph per grid step: 4 GAT layers + 3 fused MLP heads + loss reduction."""
    # constant per-head 0/1 lane masks over the HIDDEN columns (hoisted, built once)
    lane = lax.broadcasted_iota(jnp.int32, (1, HIDDEN), 1)
    head_masks = [jnp.logical_and(lane >= h * FH, lane < (h + 1) * FH)
                  .astype(jnp.float32) for h in range(HEADS)]

    def gat_layer(x, adj_bias_stacked, l, apply_act):
        n = adj_bias_stacked.shape[0] // HEADS
        # Folded projection: one MXU issue gives per-head features AND both score vecs.
        z_ext = jnp.dot(x, w_ref[l], preferred_element_type=jnp.float32)   # [n, 36]
        z = z_ext[:, :HIDDEN]                                              # [n, 32]
        s_dst = z_ext[:, HIDDEN:HIDDEN + HEADS]                            # [n, H]
        s_src_t = z_ext[:, HIDDEN + HEADS:HIDDEN + 2 * HEADS].T            # [H, n]
        # Heads stacked along sublanes -> single LeakyReLU / mask / softmax pass.
        e = jnp.concatenate(
            [s_dst[:, h:h + 1] + s_src_t[h:h + 1, :] for h in range(HEADS)], axis=0)
        e = jnp.where(e > 0, e, NEG_SLOPE * e)          # LeakyReLU
        e = e + adj_bias_stacked                        # additive adjacency mask
        m = jnp.max(e, axis=1, keepdims=True)
        p = jnp.exp(e - m)
        denom = jnp.sum(p, axis=1, keepdims=True)
        alpha = p * pl.reciprocal(jnp.maximum(denom, 1e-16), approx=True)
        # Per-head aggregation via lane masks (no lane slices, no concat).
        out = jnp.dot(alpha[0:n], z * head_masks[0],
                      preferred_element_type=jnp.float32)
        for h in range(1, HEADS):
            out = out + jnp.dot(alpha[h * n:(h + 1) * n], z * head_masks[h],
                                preferred_element_type=jnp.float32)
        out = out + b_ref[l]
        if apply_act:
            out = jnp.maximum(out, 0.0)
        return out

    # ----------------------------- encoder ---------------------------------
    h = nf_ref[0]                                    # [NT_P, F_P]
    adj_enc2 = aenc_ref[0]                           # [HEADS*NT_P, NT_P] additive bias
    for l in range(ENC_LAYERS):
        h = gat_layer(h, adj_enc2, l, apply_act=(l < ENC_LAYERS - 1))
    enc_out = h                                      # [NT_P, HIDDEN]

    # -------- fused gather: rows [0:E_P) node_feat_idx, [E_P:2E_P) diffs_idx ----
    gathered = jnp.dot(gall_ref[0], enc_out, preferred_element_type=jnp.float32)
    g = gathered[:E_P]                               # decoder input
    enc_sel = gathered[E_P:]                         # encoder_outputs[diffs_idx[:,0]]

    # ----------------------------- decoder ---------------------------------
    adj_dec2 = adec_ref[0]                           # [HEADS*E_P, E_P] additive bias
    for l in range(DEC_LAYERS):
        g = gat_layer(g, adj_dec2, ENC_LAYERS + l, apply_act=(l < DEC_LAYERS - 1))
    d = enc_sel - g                                  # diffs [E_P, HIDDEN]

    # ------------------- three fused output MLP heads ----------------------
    h1 = jnp.maximum(jnp.dot(d, hw_ref[0][:HIDDEN, :],
                             preferred_element_type=jnp.float32) + hb_ref[0], 0.0)
    h2 = jnp.maximum(jnp.dot(h1, hw_ref[1],
                             preferred_element_type=jnp.float32) + hb_ref[1], 0.0)
    out3 = jnp.dot(h2, hw_ref[2], preferred_element_type=jnp.float32) + hb_ref[2]

    alpha_logits = out3[:, 0:K_MIX]                  # [E_P, K]
    theta1 = out3[:, K_MIX:2 * K_MIX]
    theta2 = out3[:, 2 * K_MIX:3 * K_MIX]

    prev_lab = plab_ref[0]                           # [E_P, 2]
    prev = prev_lab[:, 0:1]
    lab = prev_lab[:, 1:2]
    theta = theta1 * prev + theta2 * (1.0 - prev)
    # BCEWithLogitsLoss(reduction='none'), labels broadcast over mixture dim
    adj_loss = (jnp.maximum(theta, 0.0) - theta * lab
                + jnp.log(1.0 + jnp.exp(-jnp.abs(theta))))           # [E_P, K]

    # ---------------- fused subgraph reduction (single matmul) -------------
    red = jnp.dot(oh_ref[0], jnp.concatenate([adj_loss, alpha_logits], axis=1),
                  preferred_element_type=jnp.float32)                # [S_P, 2K]
    red_loss = red[:, :K_MIX]
    red_alpha = red[:, K_MIX:2 * K_MIX] * invc_ref[0]                # scatter-mean

    # log_softmax over mixture components
    m = jnp.max(red_alpha, axis=1, keepdims=True)
    lse = jnp.log(jnp.sum(jnp.exp(red_alpha - m), axis=1, keepdims=True)) + m
    lp_ = -red_loss + (red_alpha - lse)
    # logsumexp over K
    m2 = jnp.max(lp_, axis=1, keepdims=True)
    log_prob = jnp.log(jnp.sum(jnp.exp(lp_ - m2), axis=1, keepdims=True)) + m2
    # padded subgraph rows contribute exactly 0 (red == 0, inv_count == 1)
    partial = -(jnp.sum(log_prob) * inv_batch)
    # lane-dense output tile (unmasked vst)
    loss_ref[...] = jnp.zeros((1, 1, 128), jnp.float32) + partial


# ------------------------------ wrapper --------------------------------------
def dmnets_gnn_mb_forward(packed_params, kdata):
    """Forward pass (is_sampling=False, eval mode) returning the scalar loss."""
    operands = [kdata["node_feat"], kdata["adj_enc_bias"], kdata["adj_dec_bias"],
                kdata["g_all"], kdata["prev_labels"], kdata["onehot"],
                kdata["inv_count"],
                packed_params["w_stack"], packed_params["b_stack"],
                packed_params["head_w"], packed_params["head_b"]]

    kern = functools.partial(fused_forward_kernel, inv_batch=1.0 / B)

    grid_spec = pltpu.PrefetchScalarGridSpec(
        num_scalar_prefetch=0,
        grid=(B,),
        in_specs=[
            pl.BlockSpec((1, NT_P, F_P), lambda b: (b, 0, 0)),
            pl.BlockSpec((1, HEADS * NT_P, NT_P), lambda b: (b, 0, 0)),
            pl.BlockSpec((1, HEADS * E_P, E_P), lambda b: (b, 0, 0)),
            pl.BlockSpec((1, 2 * E_P, NT_P), lambda b: (b, 0, 0)),
            pl.BlockSpec((1, E_P, 2), lambda b: (b, 0, 0)),
            pl.BlockSpec((1, S_P, E_P), lambda b: (b, 0, 0)),
            pl.BlockSpec((1, S_P, 1), lambda b: (b, 0, 0)),
            # shared parameters: constant block across the grid (fetched once)
            pl.BlockSpec((L_GAT, F_P, W_EXT), lambda b: (0, 0, 0)),
            pl.BlockSpec((L_GAT, 1, HIDDEN), lambda b: (0, 0, 0)),
            pl.BlockSpec((3, H3, H3), lambda b: (0, 0, 0)),
            pl.BlockSpec((3, 1, H3), lambda b: (0, 0, 0)),
        ],
        out_specs=pl.BlockSpec((1, 1, 128), lambda b: (b, 0, 0)),
    )
    out = pl.pallas_call(
        kern,
        out_shape=jax.ShapeDtypeStruct((B, 1, 128), jnp.float32),
        grid_spec=grid_spec,
        compiler_params=pltpu.CompilerParams(
            dimension_semantics=("parallel",)),
    )(*operands)
    # per-graph partials already carry the -1/B factor; sum gives the module's loss
    return jnp.sum(out[:, 0, 0])


# ------------------------- parameter packing ---------------------------------
def _block_diag(mats):
    mats = [np.array(m, np.float32) for m in mats]
    rows = sum(m.shape[0] for m in mats)
    cols = sum(m.shape[1] for m in mats)
    out = np.zeros((rows, cols), np.float32)
    ro = co = 0
    for m in mats:
        out[ro:ro + m.shape[0], co:co + m.shape[1]] = m
        ro += m.shape[0]
        co += m.shape[1]
    return out


def pack_params(gat_params, head_params):
    """Fold attention projections into the GAT weights; fuse the 3 output heads."""
    # --- GAT layers: W_ext = [W | W@A_dst | W@A_src], stacked over layers ---
    w_list, b_list = [], []
    for (W, a_src, a_dst, bias) in gat_params:
        W = np.array(W, np.float32)
        a_src = np.array(a_src, np.float32)
        a_dst = np.array(a_dst, np.float32)
        Wp = np.zeros((F_P, HIDDEN), np.float32)
        Wp[:W.shape[0], :] = W
        A_dst = np.zeros((HIDDEN, HEADS), np.float32)
        A_src = np.zeros((HIDDEN, HEADS), np.float32)
        for h in range(HEADS):
            A_dst[h * FH:(h + 1) * FH, h] = a_dst[h]
            A_src[h * FH:(h + 1) * FH, h] = a_src[h]
        w_list.append(np.concatenate([Wp, Wp @ A_dst, Wp @ A_src], axis=1))
        b_list.append(np.array(bias, np.float32).reshape(1, HIDDEN))
    w_stack = np.stack(w_list)                       # [L_GAT, F_P, W_EXT]
    b_stack = np.stack(b_list)                       # [L_GAT, 1, HIDDEN]

    # --- output heads: concat W1, block-diag W2/W3, padded into [3, H3, H3] ---
    W1s, b1s, W2s, b2s, W3s, b3s = [np.array(v, np.float32) for v in head_params]
    head_w = np.zeros((3, H3, H3), np.float32)
    head_b = np.zeros((3, 1, H3), np.float32)
    head_w[0, :HIDDEN, :] = np.concatenate([W1s[i] for i in range(3)], axis=1)
    head_w[1] = _block_diag([W2s[i] for i in range(3)])
    head_w[2, :, :3 * K_MIX] = _block_diag([W3s[i] for i in range(3)])
    head_b[0, 0, :] = np.concatenate([b1s[i] for i in range(3)], axis=1)[0]
    head_b[1, 0, :] = np.concatenate([b2s[i] for i in range(3)], axis=1)[0]
    head_b[2, 0, :3 * K_MIX] = np.concatenate([b3s[i] for i in range(3)], axis=1)[0]
    return {"w_stack": jnp.asarray(w_stack), "b_stack": jnp.asarray(b_stack),
            "head_w": jnp.asarray(head_w), "head_b": jnp.asarray(head_b)}


# ------------------------- pure-JAX reference --------------------------------
def _gat_layer_ref(x, adj, W, a_src, a_dst, b, apply_act):
    z = x @ W
    outs = []
    for h in range(HEADS):
        zh = z[:, h * FH:(h + 1) * FH]
        e = (zh @ a_dst[h])[:, None] + (zh @ a_src[h])[None, :]
        e = jnp.where(e > 0, e, NEG_SLOPE * e)
        e = jnp.where(adj > 0, e, -1e9)
        outs.append(jax.nn.softmax(e, axis=1) @ zh)
    out = jnp.concatenate(outs, axis=1) + b
    return jnp.maximum(out, 0.0) if apply_act else out


def _forward_ref(params, data):
    h = data["node_feat"]
    for l, lp in enumerate(params["enc"]):
        h = _gat_layer_ref(h, data["adj_enc_mask"], *lp,
                           apply_act=(l < len(params["enc"]) - 1))
    enc_out = h
    g = enc_out[data["node_feat_idx"]]
    for l, lp in enumerate(params["dec"]):
        g = _gat_layer_ref(g, data["adj_dec_mask"], *lp,
                           apply_act=(l < len(params["dec"]) - 1))
    d = enc_out[data["diffs_idx0"]] - g
    W1s, b1s, W2s, b2s, W3s, b3s = params["heads"]

    def mlp(i):
        h1 = jax.nn.relu(d @ W1s[i] + b1s[i])
        h2 = jax.nn.relu(h1 @ W2s[i] + b2s[i])
        return h2 @ W3s[i] + b3s[i]

    alpha, th1, th2 = mlp(0), mlp(1), mlp(2)
    prev = data["prev_edges"][:, None]
    lab = data["labels"][:, None]
    theta = th1 * prev + th2 * (1.0 - prev)
    adj_loss = jnp.maximum(theta, 0.0) - theta * lab + jnp.log1p(jnp.exp(-jnp.abs(theta)))
    onehot = data["subgraph_onehot"]
    red_loss = onehot @ adj_loss
    red_alpha = (onehot @ alpha) * data["subgraph_inv_count"][:, None]
    lp = -red_loss + jax.nn.log_softmax(red_alpha, axis=-1)
    log_prob = jax.scipy.special.logsumexp(lp, axis=1)
    return -(jnp.sum(log_prob) * data["inv_batch"])


# --------------------------------- main ---------------------------------------
if __name__ == "__main__":
    key = jax.random.PRNGKey(0)
    k_adj, k_prev, k_params = jax.random.split(key, 3)

    # --- synthetic graph data (deterministic) ---
    A_low = jax.random.bernoulli(k_adj, 0.5, (B, N_NODES, N_NODES)).astype(jnp.float32)
    A_low = A_low * jnp.tril(jnp.ones((N_NODES, N_NODES), jnp.float32), k=-1)
    A_np = np.array(A_low)
    A_sym = A_np + np.transpose(A_np, (0, 2, 1))

    # ---------------- global (reference) data ----------------
    NT = B * N_NODES
    adj_enc_g = np.zeros((NT, NT), np.float32)
    node_feat_g = np.zeros((NT, N_NODES), np.float32)
    for b in range(B):
        adj_enc_g[b * N_NODES:(b + 1) * N_NODES, b * N_NODES:(b + 1) * N_NODES] = A_sym[b]
        for v in range(N_NODES):
            node_feat_g[b * N_NODES + v, v] = 1.0
    adj_enc_g += np.eye(NT, dtype=np.float32)

    node_feat_idx, diffs_idx0, subgraph_idx, labels_list, blocks = [], [], [], [], []
    start = 0
    for b in range(B):
        for i in range(1, N_NODES):
            node_feat_idx += [b * N_NODES + j for j in range(i)]
            diffs_idx0 += [b * N_NODES + i] * i
            subgraph_idx += [b * (N_NODES - 1) + (i - 1)] * i
            labels_list += [float(A_np[b, i, j]) for j in range(i)]
            blocks.append((start, i, b))
            start += i
    E = start                      # 30
    S = B * (N_NODES - 1)          # 10

    adj_dec_g = np.zeros((E, E), np.float32)
    for (st, sz, b) in blocks:
        adj_dec_g[st:st + sz, st:st + sz] = A_sym[b, :sz, :sz]
    adj_dec_g += np.eye(E, dtype=np.float32)

    node_feat_idx = np.array(node_feat_idx, np.int32)
    diffs_idx0 = np.array(diffs_idx0, np.int32)
    subgraph_idx = np.array(subgraph_idx, np.int32)
    labels_np = np.array(labels_list, np.float32)

    onehot_g = (subgraph_idx[None, :] == np.arange(S)[:, None]).astype(np.float32)
    invc_g = (1.0 / onehot_g.sum(axis=1)).astype(np.float32)

    prev_edges = np.array(jax.random.bernoulli(k_prev, 0.5, (E,)).astype(jnp.float32))

    rdata = {
        "node_feat": jnp.asarray(node_feat_g),
        "adj_enc_mask": jnp.asarray(adj_enc_g),
        "adj_dec_mask": jnp.asarray(adj_dec_g),
        "node_feat_idx": jnp.asarray(node_feat_idx),
        "diffs_idx0": jnp.asarray(diffs_idx0),
        "prev_edges": jnp.asarray(prev_edges),
        "labels": jnp.asarray(labels_np),
        "subgraph_onehot": jnp.asarray(onehot_g),
        "subgraph_inv_count": jnp.asarray(invc_g),
        "inv_batch": float(1.0 / B),
    }

    # ---------------- padded per-graph kernel data ----------------
    node_feat_k = np.zeros((B, NT_P, F_P), np.float32)
    adj_enc_bias = np.full((B, HEADS * NT_P, NT_P), NEG_INF, np.float32)
    adj_dec_bias = np.full((B, HEADS * E_P, E_P), NEG_INF, np.float32)
    g_all = np.zeros((B, 2 * E_P, NT_P), np.float32)
    prev_labels = np.zeros((B, E_P, 2), np.float32)
    onehot_k = np.zeros((B, S_P, E_P), np.float32)
    inv_count_k = np.ones((B, S_P, 1), np.float32)   # 1.0 on padded rows -> no inf/NaN

    for b in range(B):
        # encoder adjacency as additive bias, pre-stacked over heads
        adj_e = A_sym[b] + np.eye(N_NODES, dtype=np.float32)
        bias_e = np.full((NT_P, NT_P), NEG_INF, np.float32)
        bias_e[:N_NODES, :N_NODES] = np.where(adj_e > 0, 0.0, NEG_INF)
        adj_enc_bias[b] = np.concatenate([bias_e] * HEADS, axis=0)

        # decoder adjacency (block-diagonal over prefix subgraphs + self loops)
        adj_d = np.zeros((E_G, E_G), np.float32)
        st = 0
        for i in range(1, N_NODES):
            adj_d[st:st + i, st:st + i] = A_sym[b, :i, :i]
            st += i
        adj_d += np.eye(E_G, dtype=np.float32)
        bias_d = np.full((E_P, E_P), NEG_INF, np.float32)
        bias_d[:E_G, :E_G] = np.where(adj_d > 0, 0.0, NEG_INF)
        adj_dec_bias[b] = np.concatenate([bias_d] * HEADS, axis=0)

        node_feat_k[b, np.arange(N_NODES), np.arange(N_NODES)] = 1.0

        r = 0
        for i in range(1, N_NODES):
            for j in range(i):
                g_all[b, r, j] = 1.0            # node_feat_idx gather (local index)
                g_all[b, E_P + r, i] = 1.0      # diffs_idx[:, 0] gather (local index)
                prev_labels[b, r, 0] = prev_edges[b * E_G + r]
                prev_labels[b, r, 1] = A_np[b, i, j]
                onehot_k[b, i - 1, r] = 1.0
                r += 1
            inv_count_k[b, i - 1, 0] = 1.0 / i

    kdata = {
        "node_feat": jnp.asarray(node_feat_k),
        "adj_enc_bias": jnp.asarray(adj_enc_bias),
        "adj_dec_bias": jnp.asarray(adj_dec_bias),
        "g_all": jnp.asarray(g_all),
        "prev_labels": jnp.asarray(prev_labels),
        "onehot": jnp.asarray(onehot_k),
        "inv_count": jnp.asarray(inv_count_k),
    }

    # --- deterministic parameter init ---
    def dense_init(k, fan_in, fan_out):
        kw, kb = jax.random.split(k)
        w = jax.random.normal(kw, (fan_in, fan_out), jnp.float32) / np.sqrt(fan_in)
        bb = 0.01 * jax.random.normal(kb, (1, fan_out), jnp.float32)
        return w, bb

    def gat_init(k, fan_in):
        kw, ks, kd, kb = jax.random.split(k, 4)
        W = jax.random.normal(kw, (fan_in, HEADS * FH), jnp.float32) / np.sqrt(fan_in)
        a_src = jax.random.normal(ks, (HEADS, FH), jnp.float32) / np.sqrt(FH)
        a_dst = jax.random.normal(kd, (HEADS, FH), jnp.float32) / np.sqrt(FH)
        bb = 0.01 * jax.random.normal(kb, (1, HEADS * FH), jnp.float32)
        return (W, a_src, a_dst, bb)

    keys = jax.random.split(k_params, ENC_LAYERS + DEC_LAYERS + 9)
    ki = 0
    enc_params = []
    for l in range(ENC_LAYERS):
        enc_params.append(gat_init(keys[ki], N_NODES if l == 0 else HIDDEN)); ki += 1
    dec_params = []
    for l in range(DEC_LAYERS):
        dec_params.append(gat_init(keys[ki], HIDDEN)); ki += 1
    W1s, b1s, W2s, b2s, W3s, b3s = [], [], [], [], [], []
    for _ in range(3):  # 0: output_alpha, 1: output_theta_1, 2: output_theta_2
        w1, bb1 = dense_init(keys[ki], HIDDEN, HIDDEN); ki += 1
        w2, bb2 = dense_init(keys[ki], HIDDEN, HIDDEN); ki += 1
        w3, bb3 = dense_init(keys[ki], HIDDEN, K_MIX); ki += 1
        W1s.append(w1); b1s.append(bb1); W2s.append(w2); b2s.append(bb2)
        W3s.append(w3); b3s.append(bb3)
    head_params = (jnp.stack(W1s), jnp.stack(b1s), jnp.stack(W2s),
                   jnp.stack(b2s), jnp.stack(W3s), jnp.stack(b3s))
    raw_params = {"enc": enc_params, "dec": dec_params, "heads": head_params}

    packed_params = pack_params(enc_params + dec_params, head_params)

    # --- run fused Pallas kernel ---
    loss = dmnets_gnn_mb_forward(packed_params, kdata)
    loss = jax.block_until_ready(loss)

    # --- validate against pure-JAX reference ---
    loss_ref = jax.block_until_ready(_forward_ref(raw_params, rdata))
    np.testing.assert_allclose(np.array(loss), np.array(loss_ref), rtol=1e-2, atol=1e-2)
    assert np.isfinite(np.array(loss))

    print("KERNEL_OK")
</pallas_src>

<mosaic_0001>
module attributes {stable_mosaic.version = 11 : i64} {
  func.func @fused_forward_kernel(%arg0: i32, %arg1: memref<1x8x32xf32, #tpu.memory_space<vmem>>, %arg2: memref<1x16x8xf32, #tpu.memory_space<vmem>>, %arg3: memref<1x32x16xf32, #tpu.memory_space<vmem>>, %arg4: memref<1x32x8xf32, #tpu.memory_space<vmem>>, %arg5: memref<1x16x2xf32, #tpu.memory_space<vmem>>, %arg6: memref<1x8x16xf32, #tpu.memory_space<vmem>>, %arg7: memref<1x8x1xf32, #tpu.memory_space<vmem>>, %arg8: memref<4x32x36xf32, #tpu.memory_space<vmem>>, %arg9: memref<4x1x32xf32, #tpu.memory_space<vmem>>, %arg10: memref<3x96x96xf32, #tpu.memory_space<vmem>>, %arg11: memref<3x1x96xf32, #tpu.memory_space<vmem>>, %arg12: memref<1x1x128xf32, #tpu.memory_space<vmem>>) attributes {dimension_semantics = [#tpu.dimension_semantics<parallel>], iteration_bounds = array<i64: 2>, scalar_prefetch = 0 : i64, scratch_operands = 0 : i64, tpu.core_type = #tpu.core_type<tc>, window_params = [{transform_indices = @transform_0, window_bounds = array<i64: 1, 8, 32>}, {transform_indices = @transform_1, window_bounds = array<i64: 1, 16, 8>}, {transform_indices = @transform_2, window_bounds = array<i64: 1, 32, 16>}, {transform_indices = @transform_3, window_bounds = array<i64: 1, 32, 8>}, {transform_indices = @transform_4, window_bounds = array<i64: 1, 16, 2>}, {transform_indices = @transform_5, window_bounds = array<i64: 1, 8, 16>}, {transform_indices = @transform_6, window_bounds = array<i64: 1, 8, 1>}, {pipeline_mode = #tpu.pipeline_mode<synchronous>, transform_indices = @transform_7, window_bounds = array<i64: 4, 32, 36>}, {pipeline_mode = #tpu.pipeline_mode<synchronous>, transform_indices = @transform_8, window_bounds = array<i64: 4, 1, 32>}, {pipeline_mode = #tpu.pipeline_mode<synchronous>, transform_indices = @transform_9, window_bounds = array<i64: 3, 96, 96>}, {pipeline_mode = #tpu.pipeline_mode<synchronous>, transform_indices = @transform_10, window_bounds = array<i64: 3, 1, 96>}, {transform_indices = @transform_11, window_bounds = array<i64: 1, 1, 128>}]} {
    %0 = tpu.iota {dimensions = array<i32: 1>} : vector<1x32xi32>
    %c0_i32 = arith.constant 0 : i32
    %1 = vector.broadcast %c0_i32 : i32 to vector<1x32xi32>
    %2 = arith.cmpi sge, %0, %1 : vector<1x32xi32>
    %c16_i32 = arith.constant 16 : i32
    %3 = vector.broadcast %c16_i32 : i32 to vector<1x32xi32>
    %4 = arith.cmpi slt, %0, %3 : vector<1x32xi32>
    %5 = arith.andi %2, %4 : vector<1x32xi1>
    %6 = arith.extui %5 : vector<1x32xi1> to vector<1x32xi32>
    %7 = arith.sitofp %6 : vector<1x32xi32> to vector<1x32xf32>
    %c16_i32_0 = arith.constant 16 : i32
    %8 = vector.broadcast %c16_i32_0 : i32 to vector<1x32xi32>
    %9 = arith.cmpi sge, %0, %8 : vector<1x32xi32>
    %c32_i32 = arith.constant 32 : i32
    %10 = vector.broadcast %c32_i32 : i32 to vector<1x32xi32>
    %11 = arith.cmpi slt, %0, %10 : vector<1x32xi32>
    %12 = arith.andi %9, %11 : vector<1x32xi1>
    %13 = arith.extui %12 : vector<1x32xi1> to vector<1x32xi32>
    %14 = arith.sitofp %13 : vector<1x32xi32> to vector<1x32xf32>
    %c0 = arith.constant 0 : index
    %c0_1 = arith.constant 0 : index
    %c0_2 = arith.constant 0 : index
    %15 = vector.load %arg1[%c0, %c0_1, %c0_2] : memref<1x8x32xf32, #tpu.memory_space<vmem>>, vector<1x8x32xf32>
    %16 = vector.shape_cast %15 : vector<1x8x32xf32> to vector<8x32xf32>
    %c0_3 = arith.constant 0 : index
    %c0_4 = arith.constant 0 : index
    %c0_5 = arith.constant 0 : index
    %17 = vector.load %arg2[%c0_3, %c0_4, %c0_5] : memref<1x16x8xf32, #tpu.memory_space<vmem>>, vector<1x16x8xf32>
    %18 = vector.shape_cast %17 : vector<1x16x8xf32> to vector<16x8xf32>
    %c0_6 = arith.constant 0 : index
    %c0_7 = arith.constant 0 : index
    %c0_8 = arith.constant 0 : index
    %19 = vector.load %arg8[%c0_6, %c0_7, %c0_8] : memref<4x32x36xf32, #tpu.memory_space<vmem>>, vector<1x32x36xf32>
    %20 = vector.shape_cast %19 : vector<1x32x36xf32> to vector<32x36xf32>
    %cst = arith.constant dense<0.000000e+00> : vector<8x36xf32>
    %21 = tpu.matmul %16, %20, %cst {dimension_numbers = #tpu.dot_dimension_numbers<[1], [0], [0], [1], [0, 0, 1, 1], [], []>} : vector<8x32xf32>, vector<32x36xf32>, vector<8x36xf32> -> vector<8x36xf32>
    %22 = vector.extract_strided_slice %21 {offsets = [0, 0], sizes = [8, 32], strides = [1, 1]} : vector<8x36xf32> to vector<8x32xf32>
    %23 = vector.extract_strided_slice %21 {offsets = [0, 32], sizes = [8, 2], strides = [1, 1]} : vector<8x36xf32> to vector<8x2xf32>
    %24 = vector.extract_strided_slice %21 {offsets = [0, 34], sizes = [8, 2], strides = [1, 1]} : vector<8x36xf32> to vector<8x2xf32>
    %25 = tpu.transpose %24, [1, 0] : vector<8x2xf32> -> vector<2x8xf32>
    %26 = vector.extract_strided_slice %23 {offsets = [0, 0], sizes = [8, 1], strides = [1, 1]} : vector<8x2xf32> to vector<8x1xf32>
    %27 = vector.extract_strided_slice %25 {offsets = [0, 0], sizes = [1, 8], strides = [1, 1]} : vector<2x8xf32> to vector<1x8xf32>
    %28 = vector.broadcast %26 : vector<8x1xf32> to vector<8x8xf32>
    %29 = vector.broadcast %27 : vector<1x8xf32> to vector<8x8xf32>
    %30 = arith.addf %28, %29 : vector<8x8xf32>
    %31 = vector.extract_strided_slice %23 {offsets = [0, 1], sizes = [8, 1], strides = [1, 1]} : vector<8x2xf32> to vector<8x1xf32>
    %32 = vector.extract_strided_slice %25 {offsets = [1, 0], sizes = [1, 8], strides = [1, 1]} : vector<2x8xf32> to vector<1x8xf32>
    %33 = vector.broadcast %31 : vector<8x1xf32> to vector<8x8xf32>
    %34 = vector.broadcast %32 : vector<1x8xf32> to vector<8x8xf32>
    %35 = arith.addf %33, %34 : vector<8x8xf32>
    %36 = tpu.concatenate %30, %35 in 0 : vector<8x8xf32>, vector<8x8xf32> -> vector<16x8xf32>
    %cst_9 = arith.constant 0.000000e+00 : f32
    %37 = vector.broadcast %cst_9 : f32 to vector<16x8xf32>
    %38 = arith.cmpf ogt, %36, %37 : vector<16x8xf32>
    %cst_10 = arith.constant 2.000000e-01 : f32
    %39 = vector.broadcast %cst_10 : f32 to vector<16x8xf32>
    %40 = arith.mulf %39, %36 : vector<16x8xf32>
    %41 = arith.select %38, %36, %40 : vector<16x8xi1>, vector<16x8xf32>
    %42 = arith.addf %41, %18 : vector<16x8xf32>
    %cst_11 = arith.constant dense<0xFF800000> : vector<16xf32>
    %43 = vector.multi_reduction <maximumf>, %42, %cst_11 [1] : vector<16x8xf32> to vector<16xf32>
    %44 = vector.shape_cast %43 : vector<16xf32> to vector<16x1xf32>
    %45 = vector.broadcast %44 : vector<16x1xf32> to vector<16x8xf32>
    %46 = arith.subf %42, %45 : vector<16x8xf32>
    %47 = math.exp %46 : vector<16x8xf32>
    %cst_12 = arith.constant dense<0.000000e+00> : vector<16xf32>
    %48 = vector.multi_reduction <add>, %47, %cst_12 [1] : vector<16x8xf32> to vector<16xf32>
    %49 = vector.shape_cast %48 : vector<16xf32> to vector<16x1xf32>
    %cst_13 = arith.constant 1.000000e-16 : f32
    %50 = vector.broadcast %cst_13 : f32 to vector<16x1xf32>
    %51 = arith.maximumf %49, %50 : vector<16x1xf32>
    %52 = tpu.reciprocal %51 {approx = true} : vector<16x1xf32> -> vector<16x1xf32>
    %53 = vector.broadcast %52 : vector<16x1xf32> to vector<16x8xf32>
    %54 = arith.mulf %47, %53 : vector<16x8xf32>
    %55 = vector.extract_strided_slice %54 {offsets = [0, 0], sizes = [8, 8], strides = [1, 1]} : vector<16x8xf32> to vector<8x8xf32>
    %56 = vector.broadcast %7 : vector<1x32xf32> to vector<8x32xf32>
    %57 = arith.mulf %22, %56 : vector<8x32xf32>
    %cst_14 = arith.constant dense<0.000000e+00> : vector<8x32xf32>
    %58 = tpu.matmul %55, %57, %cst_14 {dimension_numbers = #tpu.dot_dimension_numbers<[1], [0], [0], [1], [0, 0, 1, 1], [], []>} : vector<8x8xf32>, vector<8x32xf32>, vector<8x32xf32> -> vector<8x32xf32>
    %59 = vector.extract_strided_slice %54 {offsets = [8, 0], sizes = [8, 8], strides = [1, 1]} : vector<16x8xf32> to vector<8x8xf32>
    %60 = vector.broadcast %14 : vector<1x32xf32> to vector<8x32xf32>
    %61 = arith.mulf %22, %60 : vector<8x32xf32>
    %cst_15 = arith.constant dense<0.000000e+00> : vector<8x32xf32>
    %62 = tpu.matmul %59, %61, %cst_15 {dimension_numbers = #tpu.dot_dimension_numbers<[1], [0], [0], [1], [0, 0, 1, 1], [], []>} : vector<8x8xf32>, vector<8x32xf32>, vector<8x32xf32> -> vector<8x32xf32>
    %63 = arith.addf %58, %62 : vector<8x32xf32>
    %c0_16 = arith.constant 0 : index
    %c0_17 = arith.constant 0 : index
    %c0_18 = arith.constant 0 : index
    %64 = vector.load %arg9[%c0_16, %c0_17, %c0_18] : memref<4x1x32xf32, #tpu.memory_space<vmem>>, vector<1x1x32xf32>
    %65 = vector.shape_cast %64 : vector<1x1x32xf32> to vector<1x32xf32>
    %66 = vector.broadcast %65 : vector<1x32xf32> to vector<8x32xf32>
    %67 = arith.addf %63, %66 : vector<8x32xf32>
    %cst_19 = arith.constant 0.000000e+00 : f32
    %68 = vector.broadcast %cst_19 : f32 to vector<8x32xf32>
    %69 = arith.maximumf %67, %68 : vector<8x32xf32>
    %c1 = arith.constant 1 : index
    %c0_20 = arith.constant 0 : index
    %c0_21 = arith.constant 0 : index
    %70 = vector.load %arg8[%c1, %c0_20, %c0_21] : memref<4x32x36xf32, #tpu.memory_space<vmem>>, vector<1x32x36xf32>
    %71 = vector.shape_cast %70 : vector<1x32x36xf32> to vector<32x36xf32>
    %cst_22 = arith.constant dense<0.000000e+00> : vector<8x36xf32>
    %72 = tpu.matmul %69, %71, %cst_22 {dimension_numbers = #tpu.dot_dimension_numbers<[1], [0], [0], [1], [0, 0, 1, 1], [], []>} : vector<8x32xf32>, vector<32x36xf32>, vector<8x36xf32> -> vector<8x36xf32>
    %73 = vector.extract_strided_slice %72 {offsets = [0, 0], sizes = [8, 32], strides = [1, 1]} : vector<8x36xf32> to vector<8x32xf32>
    %74 = vector.extract_strided_slice %72 {offsets = [0, 32], sizes = [8, 2], strides = [1, 1]} : vector<8x36xf32> to vector<8x2xf32>
    %75 = vector.extract_strided_slice %72 {offsets = [0, 34], sizes = [8, 2], strides = [1, 1]} : vector<8x36xf32> to vector<8x2xf32>
    %76 = tpu.transpose %75, [1, 0] : vector<8x2xf32> -> vector<2x8xf32>
    %77 = vector.extract_strided_slice %74 {offsets = [0, 0], sizes = [8, 1], strides = [1, 1]} : vector<8x2xf32> to vector<8x1xf32>
    %78 = vector.extract_strided_slice %76 {offsets = [0, 0], sizes = [1, 8], strides = [1, 1]} : vector<2x8xf32> to vector<1x8xf32>
    %79 = vector.broadcast %77 : vector<8x1xf32> to vector<8x8xf32>
    %80 = vector.broadcast %78 : vector<1x8xf32> to vector<8x8xf32>
    %81 = arith.addf %79, %80 : vector<8x8xf32>
    %82 = vector.extract_strided_slice %74 {offsets = [0, 1], sizes = [8, 1], strides = [1, 1]} : vector<8x2xf32> to vector<8x1xf32>
    %83 = vector.extract_strided_slice %76 {offsets = [1, 0], sizes = [1, 8], strides = [1, 1]} : vector<2x8xf32> to vector<1x8xf32>
    %84 = vector.broadcast %82 : vector<8x1xf32> to vector<8x8xf32>
    %85 = vector.broadcast %83 : vector<1x8xf32> to vector<8x8xf32>
    %86 = arith.addf %84, %85 : vector<8x8xf32>
    %87 = tpu.concatenate %81, %86 in 0 : vector<8x8xf32>, vector<8x8xf32> -> vector<16x8xf32>
    %cst_23 = arith.constant 0.000000e+00 : f32
    %88 = vector.broadcast %cst_23 : f32 to vector<16x8xf32>
    %89 = arith.cmpf ogt, %87, %88 : vector<16x8xf32>
    %cst_24 = arith.constant 2.000000e-01 : f32
    %90 = vector.broadcast %cst_24 : f32 to vector<16x8xf32>
    %91 = arith.mulf %90, %87 : vector<16x8xf32>
    %92 = arith.select %89, %87, %91 : vector<16x8xi1>, vector<16x8xf32>
    %93 = arith.addf %92, %18 : vector<16x8xf32>
    %cst_25 = arith.constant dense<0xFF800000> : vector<16xf32>
    %94 = vector.multi_reduction <maximumf>, %93, %cst_25 [1] : vector<16x8xf32> to vector<16xf32>
    %95 = vector.shape_cast %94 : vector<16xf32> to vector<16x1xf32>
    %96 = vector.broadcast %95 : vector<16x1xf32> to vector<16x8xf32>
    %97 = arith.subf %93, %96 : vector<16x8xf32>
    %98 = math.exp %97 : vector<16x8xf32>
    %cst_26 = arith.constant dense<0.000000e+00> : vector<16xf32>
    %99 = vector.multi_reduction <add>, %98, %cst_26 [1] : vector<16x8xf32> to vector<16xf32>
    %100 = vector.shape_cast %99 : vector<16xf32> to vector<16x1xf32>
    %cst_27 = arith.constant 1.000000e-16 : f32
    %101 = vector.broadcast %cst_27 : f32 to vector<16x1xf32>
    %102 = arith.maximumf %100, %101 : vector<16x1xf32>
    %103 = tpu.reciprocal %102 {approx = true} : vector<16x1xf32> -> vector<16x1xf32>
    %104 = vector.broadcast %103 : vector<16x1xf32> to vector<16x8xf32>
    %105 = arith.mulf %98, %104 : vector<16x8xf32>
    %106 = vector.extract_strided_slice %105 {offsets = [0, 0], sizes = [8, 8], strides = [1, 1]} : vector<16x8xf32> to vector<8x8xf32>
    %107 = vector.broadcast %7 : vector<1x32xf32> to vector<8x32xf32>
    %108 = arith.mulf %73, %107 : vector<8x32xf32>
    %cst_28 = arith.constant dense<0.000000e+00> : vector<8x32xf32>
    %109 = tpu.matmul %106, %108, %cst_28 {dimension_numbers = #tpu.dot_dimension_numbers<[1], [0], [0], [1], [0, 0, 1, 1], [], []>} : vector<8x8xf32>, vector<8x32xf32>, vector<8x32xf32> -> vector<8x32xf32>
    %110 = vector.extract_strided_slice %105 {offsets = [8, 0], sizes = [8, 8], strides = [1, 1]} : vector<16x8xf32> to vector<8x8xf32>
    %111 = vector.broadcast %14 : vector<1x32xf32> to vector<8x32xf32>
    %112 = arith.mulf %73, %111 : vector<8x32xf32>
    %cst_29 = arith.constant dense<0.000000e+00> : vector<8x32xf32>
    %113 = tpu.matmul %110, %112, %cst_29 {dimension_numbers = #tpu.dot_dimension_numbers<[1], [0], [0], [1], [0, 0, 1, 1], [], []>} : vector<8x8xf32>, vector<8x32xf32>, vector<8x32xf32> -> vector<8x32xf32>
    %114 = arith.addf %109, %113 : vector<8x32xf32>
    %c1_30 = arith.constant 1 : index
    %c0_31 = arith.constant 0 : index
    %c0_32 = arith.constant 0 : index
    %115 = vector.load %arg9[%c1_30, %c0_31, %c0_32] : memref<4x1x32xf32, #tpu.memory_space<vmem>>, vector<1x1x32xf32>
    %116 = vector.shape_cast %115 : vector<1x1x32xf32> to vector<1x32xf32>
    %117 = vector.broadcast %116 : vector<1x32xf32> to vector<8x32xf32>
    %118 = arith.addf %114, %117 : vector<8x32xf32>
    %c0_33 = arith.constant 0 : index
    %c0_34 = arith.constant 0 : index
    %c0_35 = arith.constant 0 : index
    %119 = vector.load %arg4[%c0_33, %c0_34, %c0_35] : memref<1x32x8xf32, #tpu.memory_space<vmem>>, vector<1x32x8xf32>
    %120 = vector.shape_cast %119 : vector<1x32x8xf32> to vector<32x8xf32>
    %cst_36 = arith.constant dense<0.000000e+00> : vector<32x32xf32>
    %121 = tpu.matmul %120, %118, %cst_36 {dimension_numbers = #tpu.dot_dimension_numbers<[1], [0], [0], [1], [0, 0, 1, 1], [], []>} : vector<32x8xf32>, vector<8x32xf32>, vector<32x32xf32> -> vector<32x32xf32>
    %122 = vector.extract_strided_slice %121 {offsets = [0, 0], sizes = [16, 32], strides = [1, 1]} : vector<32x32xf32> to vector<16x32xf32>
    %123 = vector.extract_strided_slice %121 {offsets = [16, 0], sizes = [16, 32], strides = [1, 1]} : vector<32x32xf32> to vector<16x32xf32>
    %c0_37 = arith.constant 0 : index
    %c0_38 = arith.constant 0 : index
    %c0_39 = arith.constant 0 : index
    %124 = vector.load %arg3[%c0_37, %c0_38, %c0_39] : memref<1x32x16xf32, #tpu.memory_space<vmem>>, vector<1x32x16xf32>
    %125 = vector.shape_cast %124 : vector<1x32x16xf32> to vector<32x16xf32>
    %c2 = arith.constant 2 : index
    %c0_40 = arith.constant 0 : index
    %c0_41 = arith.constant 0 : index
    %126 = vector.load %arg8[%c2, %c0_40, %c0_41] : memref<4x32x36xf32, #tpu.memory_space<vmem>>, vector<1x32x36xf32>
    %127 = vector.shape_cast %126 : vector<1x32x36xf32> to vector<32x36xf32>
    %cst_42 = arith.constant dense<0.000000e+00> : vector<16x36xf32>
    %128 = tpu.matmul %122, %127, %cst_42 {dimension_numbers = #tpu.dot_dimension_numbers<[1], [0], [0], [1], [0, 0, 1, 1], [], []>} : vector<16x32xf32>, vector<32x36xf32>, vector<16x36xf32> -> vector<16x36xf32>
    %129 = vector.extract_strided_slice %128 {offsets = [0, 0], sizes = [16, 32], strides = [1, 1]} : vector<16x36xf32> to vector<16x32xf32>
    %130 = vector.extract_strided_slice %128 {offsets = [0, 32], sizes = [16, 2], strides = [1, 1]} : vector<16x36xf32> to vector<16x2xf32>
    %131 = vector.extract_strided_slice %128 {offsets = [0, 34], sizes = [16, 2], strides = [1, 1]} : vector<16x36xf32> to vector<16x2xf32>
    %132 = tpu.transpose %131, [1, 0] : vector<16x2xf32> -> vector<2x16xf32>
    %133 = vector.extract_strided_slice %130 {offsets = [0, 0], sizes = [16, 1], strides = [1, 1]} : vector<16x2xf32> to vector<16x1xf32>
    %134 = vector.extract_strided_slice %132 {offsets = [0, 0], sizes = [1, 16], strides = [1, 1]} : vector<2x16xf32> to vector<1x16xf32>
    %135 = vector.broadcast %133 : vector<16x1xf32> to vector<16x16xf32>
    %136 = vector.broadcast %134 : vector<1x16xf32> to vector<16x16xf32>
    %137 = arith.addf %135, %136 : vector<16x16xf32>
    %138 = vector.extract_strided_slice %130 {offsets = [0, 1], sizes = [16, 1], strides = [1, 1]} : vector<16x2xf32> to vector<16x1xf32>
    %139 = vector.extract_strided_slice %132 {offsets = [1, 0], sizes = [1, 16], strides = [1, 1]} : vector<2x16xf32> to vector<1x16xf32>
    %140 = vector.broadcast %138 : vector<16x1xf32> to vector<16x16xf32>
    %141 = vector.broadcast %139 : vector<1x16xf32> to vector<16x16xf32>
    %142 = arith.addf %140, %141 : vector<16x16xf32>
    %143 = tpu.concatenate %137, %142 in 0 : vector<16x16xf32>, vector<16x16xf32> -> vector<32x16xf32>
    %cst_43 = arith.constant 0.000000e+00 : f32
    %144 = vector.broadcast %cst_43 : f32 to vector<32x16xf32>
    %145 = arith.cmpf ogt, %143, %144 : vector<32x16xf32>
    %cst_44 = arith.constant 2.000000e-01 : f32
    %146 = vector.broadcast %cst_44 : f32 to vector<32x16xf32>
    %147 = arith.mulf %146, %143 : vector<32x16xf32>
    %148 = arith.select %145, %143, %147 : vector<32x16xi1>, vector<32x16xf32>
    %149 = arith.addf %148, %125 : vector<32x16xf32>
    %cst_45 = arith.constant dense<0xFF800000> : vector<32xf32>
    %150 = vector.multi_reduction <maximumf>, %149, %cst_45 [1] : vector<32x16xf32> to vector<32xf32>
    %151 = vector.shape_cast %150 : vector<32xf32> to vector<32x1xf32>
    %152 = vector.broadcast %151 : vector<32x1xf32> to vector<32x16xf32>
    %153 = arith.subf %149, %152 : vector<32x16xf32>
    %154 = math.exp %153 : vector<32x16xf32>
    %cst_46 = arith.constant dense<0.000000e+00> : vector<32xf32>
    %155 = vector.multi_reduction <add>, %154, %cst_46 [1] : vector<32x16xf32> to vector<32xf32>
    %156 = vector.shape_cast %155 : vector<32xf32> to vector<32x1xf32>
    %cst_47 = arith.constant 1.000000e-16 : f32
    %157 = vector.broadcast %cst_47 : f32 to vector<32x1xf32>
    %158 = arith.maximumf %156, %157 : vector<32x1xf32>
    %159 = tpu.reciprocal %158 {approx = true} : vector<32x1xf32> -> vector<32x1xf32>
    %160 = vector.broadcast %159 : vector<32x1xf32> to vector<32x16xf32>
    %161 = arith.mulf %154, %160 : vector<32x16xf32>
    %162 = vector.extract_strided_slice %161 {offsets = [0, 0], sizes = [16, 16], strides = [1, 1]} : vector<32x16xf32> to vector<16x16xf32>
    %163 = vector.broadcast %7 : vector<1x32xf32> to vector<16x32xf32>
    %164 = arith.mulf %129, %163 : vector<16x32xf32>
    %cst_48 = arith.constant dense<0.000000e+00> : vector<16x32xf32>
    %165 = tpu.matmul %162, %164, %cst_48 {dimension_numbers = #tpu.dot_dimension_numbers<[1], [0], [0], [1], [0, 0, 1, 1], [], []>} : vector<16x16xf32>, vector<16x32xf32>, vector<16x32xf32> -> vector<16x32xf32>
    %166 = vector.extract_strided_slice %161 {offsets = [16, 0], sizes = [16, 16], strides = [1, 1]} : vector<32x16xf32> to vector<16x16xf32>
    %167 = vector.broadcast %14 : vector<1x32xf32> to vector<16x32xf32>
    %168 = arith.mulf %129, %167 : vector<16x32xf32>
    %cst_49 = arith.constant dense<0.000000e+00> : vector<16x32xf32>
    %169 = tpu.matmul %166, %168, %cst_49 {dimension_numbers = #tpu.dot_dimension_numbers<[1], [0], [0], [1], [0, 0, 1, 1], [], []>} : vector<16x16xf32>, vector<16x32xf32>, vector<16x32xf32> -> vector<16x32xf32>
    %170 = arith.addf %165, %169 : vector<16x32xf32>
    %c2_50 = arith.constant 2 : index
    %c0_51 = arith.constant 0 : index
    %c0_52 = arith.constant 0 : index
    %171 = vector.load %arg9[%c2_50, %c0_51, %c0_52] : memref<4x1x32xf32, #tpu.memory_space<vmem>>, vector<1x1x32xf32>
    %172 = vector.shape_cast %171 : vector<1x1x32xf32> to vector<1x32xf32>
    %173 = vector.broadcast %172 : vector<1x32xf32> to vector<16x32xf32>
    %174 = arith.addf %170, %173 : vector<16x32xf32>
    %cst_53 = arith.constant 0.000000e+00 : f32
    %175 = vector.broadcast %cst_53 : f32 to vector<16x32xf32>
    %176 = arith.maximumf %174, %175 : vector<16x32xf32>
    %c3 = arith.constant 3 : index
    %c0_54 = arith.constant 0 : index
    %c0_55 = arith.constant 0 : index
    %177 = vector.load %arg8[%c3, %c0_54, %c0_55] : memref<4x32x36xf32, #tpu.memory_space<vmem>>, vector<1x32x36xf32>
    %178 = vector.shape_cast %177 : vector<1x32x36xf32> to vector<32x36xf32>
    %cst_56 = arith.constant dense<0.000000e+00> : vector<16x36xf32>
    %179 = tpu.matmul %176, %178, %cst_56 {dimension_numbers = #tpu.dot_dimension_numbers<[1], [0], [0], [1], [0, 0, 1, 1], [], []>} : vector<16x32xf32>, vector<32x36xf32>, vector<16x36xf32> -> vector<16x36xf32>
    %180 = vector.extract_strided_slice %179 {offsets = [0, 0], sizes = [16, 32], strides = [1, 1]} : vector<16x36xf32> to vector<16x32xf32>
    %181 = vector.extract_strided_slice %179 {offsets = [0, 32], sizes = [16, 2], strides = [1, 1]} : vector<16x36xf32> to vector<16x2xf32>
    %182 = vector.extract_strided_slice %179 {offsets = [0, 34], sizes = [16, 2], strides = [1, 1]} : vector<16x36xf32> to vector<16x2xf32>
    %183 = tpu.transpose %182, [1, 0] : vector<16x2xf32> -> vector<2x16xf32>
    %184 = vector.extract_strided_slice %181 {offsets = [0, 0], sizes = [16, 1], strides = [1, 1]} : vector<16x2xf32> to vector<16x1xf32>
    %185 = vector.extract_strided_slice %183 {offsets = [0, 0], sizes = [1, 16], strides = [1, 1]} : vector<2x16xf32> to vector<1x16xf32>
    %186 = vector.broadcast %184 : vector<16x1xf32> to vector<16x16xf32>
    %187 = vector.broadcast %185 : vector<1x16xf32> to vector<16x16xf32>
    %188 = arith.addf %186, %187 : vector<16x16xf32>
    %189 = vector.extract_strided_slice %181 {offsets = [0, 1], sizes = [16, 1], strides = [1, 1]} : vector<16x2xf32> to vector<16x1xf32>
    %190 = vector.extract_strided_slice %183 {offsets = [1, 0], sizes = [1, 16], strides = [1, 1]} : vector<2x16xf32> to vector<1x16xf32>
    %191 = vector.broadcast %189 : vector<16x1xf32> to vector<16x16xf32>
    %192 = vector.broadcast %190 : vector<1x16xf32> to vector<16x16xf32>
    %193 = arith.addf %191, %192 : vector<16x16xf32>
    %194 = tpu.concatenate %188, %193 in 0 : vector<16x16xf32>, vector<16x16xf32> -> vector<32x16xf32>
    %cst_57 = arith.constant 0.000000e+00 : f32
    %195 = vector.broadcast %cst_57 : f32 to vector<32x16xf32>
    %196 = arith.cmpf ogt, %194, %195 : vector<32x16xf32>
    %cst_58 = arith.constant 2.000000e-01 : f32
    %197 = vector.broadcast %cst_58 : f32 to vector<32x16xf32>
    %198 = arith.mulf %197, %194 : vector<32x16xf32>
    %199 = arith.select %196, %194, %198 : vector<32x16xi1>, vector<32x16xf32>
    %200 = arith.addf %199, %125 : vector<32x16xf32>
    %cst_59 = arith.constant dense<0xFF800000> : vector<32xf32>
    %201 = vector.multi_reduction <maximumf>, %200, %cst_59 [1] : vector<32x16xf32> to vector<32xf32>
    %202 = vector.shape_cast %201 : vector<32xf32> to vector<32x1xf32>
    %203 = vector.broadcast %202 : vector<32x1xf32> to vector<32x16xf32>
    %204 = arith.subf %200, %203 : vector<32x16xf32>
    %205 = math.exp %204 : vector<32x16xf32>
    %cst_60 = arith.constant dense<0.000000e+00> : vector<32xf32>
    %206 = vector.multi_reduction <add>, %205, %cst_60 [1] : vector<32x16xf32> to vector<32xf32>
    %207 = vector.shape_cast %206 : vector<32xf32> to vector<32x1xf32>
    %cst_61 = arith.constant 1.000000e-16 : f32
    %208 = vector.broadcast %cst_61 : f32 to vector<32x1xf32>
    %209 = arith.maximumf %207, %208 : vector<32x1xf32>
    %210 = tpu.reciprocal %209 {approx = true} : vector<32x1xf32> -> vector<32x1xf32>
    %211 = vector.broadcast %210 : vector<32x1xf32> to vector<32x16xf32>
    %212 = arith.mulf %205, %211 : vector<32x16xf32>
    %213 = vector.extract_strided_slice %212 {offsets = [0, 0], sizes = [16, 16], strides = [1, 1]} : vector<32x16xf32> to vector<16x16xf32>
    %214 = vector.broadcast %7 : vector<1x32xf32> to vector<16x32xf32>
    %215 = arith.mulf %180, %214 : vector<16x32xf32>
    %cst_62 = arith.constant dense<0.000000e+00> : vector<16x32xf32>
    %216 = tpu.matmul %213, %215, %cst_62 {dimension_numbers = #tpu.dot_dimension_numbers<[1], [0], [0], [1], [0, 0, 1, 1], [], []>} : vector<16x16xf32>, vector<16x32xf32>, vector<16x32xf32> -> vector<16x32xf32>
    %217 = vector.extract_strided_slice %212 {offsets = [16, 0], sizes = [16, 16], strides = [1, 1]} : vector<32x16xf32> to vector<16x16xf32>
    %218 = vector.broadcast %14 : vector<1x32xf32> to vector<16x32xf32>
    %219 = arith.mulf %180, %218 : vector<16x32xf32>
    %cst_63 = arith.constant dense<0.000000e+00> : vector<16x32xf32>
    %220 = tpu.matmul %217, %219, %cst_63 {dimension_numbers = #tpu.dot_dimension_numbers<[1], [0], [0], [1], [0, 0, 1, 1], [], []>} : vector<16x16xf32>, vector<16x32xf32>, vector<16x32xf32> -> vector<16x32xf32>
    %221 = arith.addf %216, %220 : vector<16x32xf32>
    %c3_64 = arith.constant 3 : index
    %c0_65 = arith.constant 0 : index
    %c0_66 = arith.constant 0 : index
    %222 = vector.load %arg9[%c3_64, %c0_65, %c0_66] : memref<4x1x32xf32, #tpu.memory_space<vmem>>, vector<1x1x32xf32>
    %223 = vector.shape_cast %222 : vector<1x1x32xf32> to vector<1x32xf32>
    %224 = vector.broadcast %223 : vector<1x32xf32> to vector<16x32xf32>
    %225 = arith.addf %221, %224 : vector<16x32xf32>
    %226 = arith.subf %123, %225 : vector<16x32xf32>
    %c0_67 = arith.constant 0 : index
    %c0_68 = arith.constant 0 : index
    %c0_69 = arith.constant 0 : index
    %227 = vector.load %arg10[%c0_67, %c0_68, %c0_69] : memref<3x96x96xf32, #tpu.memory_space<vmem>>, vector<1x96x96xf32>
    %228 = vector.shape_cast %227 : vector<1x96x96xf32> to vector<96x96xf32>
    %229 = vector.extract_strided_slice %228 {offsets = [0, 0], sizes = [32, 96], strides = [1, 1]} : vector<96x96xf32> to vector<32x96xf32>
    %cst_70 = arith.constant dense<0.000000e+00> : vector<16x96xf32>
    %230 = tpu.matmul %226, %229, %cst_70 {dimension_numbers = #tpu.dot_dimension_numbers<[1], [0], [0], [1], [0, 0, 1, 1], [], []>} : vector<16x32xf32>, vector<32x96xf32>, vector<16x96xf32> -> vector<16x96xf32>
    %c0_71 = arith.constant 0 : index
    %c0_72 = arith.constant 0 : index
    %c0_73 = arith.constant 0 : index
    %231 = vector.load %arg11[%c0_71, %c0_72, %c0_73] : memref<3x1x96xf32, #tpu.memory_space<vmem>>, vector<1x1x96xf32>
    %232 = vector.shape_cast %231 : vector<1x1x96xf32> to vector<1x96xf32>
    %233 = vector.broadcast %232 : vector<1x96xf32> to vector<16x96xf32>
    %234 = arith.addf %230, %233 : vector<16x96xf32>
    %cst_74 = arith.constant 0.000000e+00 : f32
    %235 = vector.broadcast %cst_74 : f32 to vector<16x96xf32>
    %236 = arith.maximumf %234, %235 : vector<16x96xf32>
    %c1_75 = arith.constant 1 : index
    %c0_76 = arith.constant 0 : index
    %c0_77 = arith.constant 0 : index
    %237 = vector.load %arg10[%c1_75, %c0_76, %c0_77] : memref<3x96x96xf32, #tpu.memory_space<vmem>>, vector<1x96x96xf32>
    %238 = vector.shape_cast %237 : vector<1x96x96xf32> to vector<96x96xf32>
    %cst_78 = arith.constant dense<0.000000e+00> : vector<16x96xf32>
    %239 = tpu.matmul %236, %238, %cst_78 {dimension_numbers = #tpu.dot_dimension_numbers<[1], [0], [0], [1], [0, 0, 1, 1], [], []>} : vector<16x96xf32>, vector<96x96xf32>, vector<16x96xf32> -> vector<16x96xf32>
    %c1_79 = arith.constant 1 : index
    %c0_80 = arith.constant 0 : index
    %c0_81 = arith.constant 0 : index
    %240 = vector.load %arg11[%c1_79, %c0_80, %c0_81] : memref<3x1x96xf32, #tpu.memory_space<vmem>>, vector<1x1x96xf32>
    %241 = vector.shape_cast %240 : vector<1x1x96xf32> to vector<1x96xf32>
    %242 = vector.broadcast %241 : vector<1x96xf32> to vector<16x96xf32>
    %243 = arith.addf %239, %242 : vector<16x96xf32>
    %cst_82 = arith.constant 0.000000e+00 : f32
    %244 = vector.broadcast %cst_82 : f32 to vector<16x96xf32>
    %245 = arith.maximumf %243, %244 : vector<16x96xf32>
    %c2_83 = arith.constant 2 : index
    %c0_84 = arith.constant 0 : index
    %c0_85 = arith.constant 0 : index
    %246 = vector.load %arg10[%c2_83, %c0_84, %c0_85] : memref<3x96x96xf32, #tpu.memory_space<vmem>>, vector<1x96x96xf32>
    %247 = vector.shape_cast %246 : vector<1x96x96xf32> to vector<96x96xf32>
    %cst_86 = arith.constant dense<0.000000e+00> : vector<16x96xf32>
    %248 = tpu.matmul %245, %247, %cst_86 {dimension_numbers = #tpu.dot_dimension_numbers<[1], [0], [0], [1], [0, 0, 1, 1], [], []>} : vector<16x96xf32>, vector<96x96xf32>, vector<16x96xf32> -> vector<16x96xf32>
    %c2_87 = arith.constant 2 : index
    %c0_88 = arith.constant 0 : index
    %c0_89 = arith.constant 0 : index
    %249 = vector.load %arg11[%c2_87, %c0_88, %c0_89] : memref<3x1x96xf32, #tpu.memory_space<vmem>>, vector<1x1x96xf32>
    %250 = vector.shape_cast %249 : vector<1x1x96xf32> to vector<1x96xf32>
    %251 = vector.broadcast %250 : vector<1x96xf32> to vector<16x96xf32>
    %252 = arith.addf %248, %251 : vector<16x96xf32>
    %253 = vector.extract_strided_slice %252 {offsets = [0, 0], sizes = [16, 4], strides = [1, 1]} : vector<16x96xf32> to vector<16x4xf32>
    %254 = vector.extract_strided_slice %252 {offsets = [0, 4], sizes = [16, 4], strides = [1, 1]} : vector<16x96xf32> to vector<16x4xf32>
    %255 = vector.extract_strided_slice %252 {offsets = [0, 8], sizes = [16, 4], strides = [1, 1]} : vector<16x96xf32> to vector<16x4xf32>
    %c0_90 = arith.constant 0 : index
    %c0_91 = arith.constant 0 : index
    %c0_92 = arith.constant 0 : index
    %256 = vector.load %arg5[%c0_90, %c0_91, %c0_92] : memref<1x16x2xf32, #tpu.memory_space<vmem>>, vector<1x16x2xf32>
    %257 = vector.shape_cast %256 : vector<1x16x2xf32> to vector<16x2xf32>
    %258 = vector.extract_strided_slice %257 {offsets = [0, 0], sizes = [16, 1], strides = [1, 1]} : vector<16x2xf32> to vector<16x1xf32>
    %259 = vector.extract_strided_slice %257 {offsets = [0, 1], sizes = [16, 1], strides = [1, 1]} : vector<16x2xf32> to vector<16x1xf32>
    %260 = vector.broadcast %258 : vector<16x1xf32> to vector<16x4xf32>
    %261 = arith.mulf %254, %260 : vector<16x4xf32>
    %cst_93 = arith.constant 1.000000e+00 : f32
    %262 = vector.broadcast %cst_93 : f32 to vector<16x1xf32>
    %263 = arith.subf %262, %258 : vector<16x1xf32>
    %264 = vector.broadcast %263 : vector<16x1xf32> to vector<16x4xf32>
    %265 = arith.mulf %255, %264 : vector<16x4xf32>
    %266 = arith.addf %261, %265 : vector<16x4xf32>
    %cst_94 = arith.constant 0.000000e+00 : f32
    %267 = vector.broadcast %cst_94 : f32 to vector<16x4xf32>
    %268 = arith.maximumf %266, %267 : vector<16x4xf32>
    %269 = vector.broadcast %259 : vector<16x1xf32> to vector<16x4xf32>
    %270 = arith.mulf %266, %269 : vector<16x4xf32>
    %271 = arith.subf %268, %270 : vector<16x4xf32>
    %272 = math.absf %266 : vector<16x4xf32>
    %cst_95 = arith.constant 0.000000e+00 : f32
    %273 = vector.broadcast %cst_95 : f32 to vector<16x4xf32>
    %274 = arith.subf %273, %272 : vector<16x4xf32>
    %275 = math.exp %274 : vector<16x4xf32>
    %cst_96 = arith.constant 1.000000e+00 : f32
    %276 = vector.broadcast %cst_96 : f32 to vector<16x4xf32>
    %277 = arith.addf %276, %275 : vector<16x4xf32>
    %278 = math.log %277 : vector<16x4xf32>
    %279 = arith.addf %271, %278 : vector<16x4xf32>
    %c0_97 = arith.constant 0 : index
    %c0_98 = arith.constant 0 : index
    %c0_99 = arith.constant 0 : index
    %280 = vector.load %arg6[%c0_97, %c0_98, %c0_99] : memref<1x8x16xf32, #tpu.memory_space<vmem>>, vector<1x8x16xf32>
    %281 = vector.shape_cast %280 : vector<1x8x16xf32> to vector<8x16xf32>
    %282 = tpu.concatenate %279, %253 in 1 : vector<16x4xf32>, vector<16x4xf32> -> vector<16x8xf32>
    %cst_100 = arith.constant dense<0.000000e+00> : vector<8x8xf32>
    %283 = tpu.matmul %281, %282, %cst_100 {dimension_numbers = #tpu.dot_dimension_numbers<[1], [0], [0], [1], [0, 0, 1, 1], [], []>} : vector<8x16xf32>, vector<16x8xf32>, vector<8x8xf32> -> vector<8x8xf32>
    %284 = vector.extract_strided_slice %283 {offsets = [0, 0], sizes = [8, 4], strides = [1, 1]} : vector<8x8xf32> to vector<8x4xf32>
    %285 = vector.extract_strided_slice %283 {offsets = [0, 4], sizes = [8, 4], strides = [1, 1]} : vector<8x8xf32> to vector<8x4xf32>
    %c0_101 = arith.constant 0 : index
    %c0_102 = arith.constant 0 : index
    %c0_103 = arith.constant 0 : index
    %286 = vector.load %arg7[%c0_101, %c0_102, %c0_103] : memref<1x8x1xf32, #tpu.memory_space<vmem>>, vector<1x8x1xf32>
    %287 = vector.shape_cast %286 : vector<1x8x1xf32> to vector<8x1xf32>
    %288 = vector.broadcast %287 : vector<8x1xf32> to vector<8x4xf32>
    %289 = arith.mulf %285, %288 : vector<8x4xf32>
    %cst_104 = arith.constant dense<0xFF800000> : vector<8xf32>
    %290 = vector.multi_reduction <maximumf>, %289, %cst_104 [1] : vector<8x4xf32> to vector<8xf32>
    %291 = vector.shape_cast %290 : vector<8xf32> to vector<8x1xf32>
    %292 = vector.broadcast %291 : vector<8x1xf32> to vector<8x4xf32>
    %293 = arith.subf %289, %292 : vector<8x4xf32>
    %294 = math.exp %293 : vector<8x4xf32>
    %cst_105 = arith.constant dense<0.000000e+00> : vector<8xf32>
    %295 = vector.multi_reduction <add>, %294, %cst_105 [1] : vector<8x4xf32> to vector<8xf32>
    %296 = vector.shape_cast %295 : vector<8xf32> to vector<8x1xf32>
    %297 = math.log %296 : vector<8x1xf32>
    %298 = arith.addf %297, %291 : vector<8x1xf32>
    %cst_106 = arith.constant 0.000000e+00 : f32
    %299 = vector.broadcast %cst_106 : f32 to vector<8x4xf32>
    %300 = arith.subf %299, %284 : vector<8x4xf32>
    %301 = vector.broadcast %298 : vector<8x1xf32> to vector<8x4xf32>
    %302 = arith.subf %289, %301 : vector<8x4xf32>
    %303 = arith.addf %300, %302 : vector<8x4xf32>
    %cst_107 = arith.constant dense<0xFF800000> : vector<8xf32>
    %304 = vector.multi_reduction <maximumf>, %303, %cst_107 [1] : vector<8x4xf32> to vector<8xf32>
    %305 = vector.shape_cast %304 : vector<8xf32> to vector<8x1xf32>
    %306 = vector.broadcast %305 : vector<8x1xf32> to vector<8x4xf32>
    %307 = arith.subf %303, %306 : vector<8x4xf32>
    %308 = math.exp %307 : vector<8x4xf32>
    %cst_108 = arith.constant dense<0.000000e+00> : vector<8xf32>
    %309 = vector.multi_reduction <add>, %308, %cst_108 [1] : vector<8x4xf32> to vector<8xf32>
    %310 = vector.shape_cast %309 : vector<8xf32> to vector<8x1xf32>
    %311 = math.log %310 : vector<8x1xf32>
    %312 = arith.addf %311, %305 : vector<8x1xf32>
    %313 = vector.shape_cast %312 : vector<8x1xf32> to vector<1x8x1xf32>
    %cst_109 = arith.constant dense<0.000000e+00> : vector<1xf32>
    %314 = vector.multi_reduction <add>, %313, %cst_109 [1, 2] : vector<1x8x1xf32> to vector<1xf32>
    %315 = vector.shape_cast %314 : vector<1xf32> to vector<1x1x1xf32>
    %316 = vector.extract %315[0, 0, 0] : f32 from vector<1x1x1xf32>
    %cst_110 = arith.constant 5.000000e-01 : f32
    %317 = arith.mulf %316, %cst_110 : f32
    %cst_111 = arith.constant 0.000000e+00 : f32
    %318 = arith.subf %cst_111, %317 : f32
    %cst_112 = arith.constant 0.000000e+00 : f32
    %319 = vector.broadcast %cst_112 : f32 to vector<1x1x128xf32>
    %320 = vector.broadcast %318 : f32 to vector<1x1x128xf32>
    %321 = arith.addf %319, %320 : vector<1x1x128xf32>
    %c0_113 = arith.constant 0 : index
    %c0_114 = arith.constant 0 : index
    %c0_115 = arith.constant 0 : index
    %322 = vector.load %arg12[%c0_113, %c0_114, %c0_115] : memref<1x1x128xf32, #tpu.memory_space<vmem>>, vector<1x1x128xf32>
    tpu.vector_store %arg12[%c0_113, %c0_114, %c0_115], %321 {strides = array<i32>} : memref<1x1x128xf32, #tpu.memory_space<vmem>>, vector<1x1x128xf32>,
    return
  }
  func.func @transform_0(%arg0: i32) -> (i32, i32, i32) {
    %c0_i32 = arith.constant 0 : i32
    %c0_i32_0 = arith.constant 0 : i32
    %c0_i32_1 = arith.constant 0 : i32
    return %arg0, %c0_i32, %c0_i32_0 : i32, i32, i32
  }
  func.func @transform_1(%arg0: i32) -> (i32, i32, i32) {
    %c0_i32 = arith.constant 0 : i32
    %c0_i32_0 = arith.constant 0 : i32
    %c0_i32_1 = arith.constant 0 : i32
    return %arg0, %c0_i32, %c0_i32_0 : i32, i32, i32
  }
  func.func @transform_2(%arg0: i32) -> (i32, i32, i32) {
    %c0_i32 = arith.constant 0 : i32
    %c0_i32_0 = arith.constant 0 : i32
    %c0_i32_1 = arith.constant 0 : i32
    return %arg0, %c0_i32, %c0_i32_0 : i32, i32, i32
  }
  func.func @transform_3(%arg0: i32) -> (i32, i32, i32) {
    %c0_i32 = arith.constant 0 : i32
    %c0_i32_0 = arith.constant 0 : i32
    %c0_i32_1 = arith.constant 0 : i32
    return %arg0, %c0_i32, %c0_i32_0 : i32, i32, i32
  }
  func.func @transform_4(%arg0: i32) -> (i32, i32, i32) {
    %c0_i32 = arith.constant 0 : i32
    %c0_i32_0 = arith.constant 0 : i32
    %c0_i32_1 = arith.constant 0 : i32
    return %arg0, %c0_i32, %c0_i32_0 : i32, i32, i32
  }
  func.func @transform_5(%arg0: i32) -> (i32, i32, i32) {
    %c0_i32 = arith.constant 0 : i32
    %c0_i32_0 = arith.constant 0 : i32
    %c0_i32_1 = arith.constant 0 : i32
    return %arg0, %c0_i32, %c0_i32_0 : i32, i32, i32
  }
  func.func @transform_6(%arg0: i32) -> (i32, i32, i32) {
    %c0_i32 = arith.constant 0 : i32
    %c0_i32_0 = arith.constant 0 : i32
    %c0_i32_1 = arith.constant 0 : i32
    return %arg0, %c0_i32, %c0_i32_0 : i32, i32, i32
  }
  func.func @transform_7(%arg0: i32) -> (i32, i32, i32) {
    %c0_i32 = arith.constant 0 : i32
    %c0_i32_0 = arith.constant 0 : i32
    %c0_i32_1 = arith.constant 0 : i32
    %c0_i32_2 = arith.constant 0 : i32
    return %c0_i32, %c0_i32_0, %c0_i32_1 : i32, i32, i32
  }
  func.func @transform_8(%arg0: i32) -> (i32, i32, i32) {
    %c0_i32 = arith.constant 0 : i32
    %c0_i32_0 = arith.constant 0 : i32
    %c0_i32_1 = arith.constant 0 : i32
    %c0_i32_2 = arith.constant 0 : i32
    return %c0_i32, %c0_i32_0, %c0_i32_1 : i32, i32, i32
  }
  func.func @transform_9(%arg0: i32) -> (i32, i32, i32) {
    %c0_i32 = arith.constant 0 : i32
    %c0_i32_0 = arith.constant 0 : i32
    %c0_i32_1 = arith.constant 0 : i32
    %c0_i32_2 = arith.constant 0 : i32
    return %c0_i32, %c0_i32_0, %c0_i32_1 : i32, i32, i32
  }
  func.func @transform_10(%arg0: i32) -> (i32, i32, i32) {
    %c0_i32 = arith.constant 0 : i32
    %c0_i32_0 = arith.constant 0 : i32
    %c0_i32_1 = arith.constant 0 : i32
    %c0_i32_2 = arith.constant 0 : i32
    return %c0_i32, %c0_i32_0, %c0_i32_1 : i32, i32, i32
  }
  func.func @transform_11(%arg0: i32) -> (i32, i32, i32) {
    %c0_i32 = arith.constant 0 : i32
    %c0_i32_0 = arith.constant 0 : i32
    %c0_i32_1 = arith.constant 0 : i32
    return %arg0, %c0_i32, %c0_i32_0 : i32, i32, i32
  }
}

</mosaic_0001>

<llo_original>
// kernel: tpu_custom_call.1
$region0: #{tpu_custom_call.1}
  #allocation0 [shape = 'u32[]', space=smem, size = 0x4, offset = 0x4, fixed_abs, tag = 'smem constant byte address 0x4 - core index']
  #allocation1 [shape = 'u32[72,128]{1,0:T(1,128)}', space=vmem, size = 0x9000, scoped, tag = 'internal scratch']
  %s0 = inlined_call_operand.vmem [shape: f32[2,8,32], index: 0, kind: input, shape index: {}]
  %s1 = inlined_call_operand.vmem [shape: f32[2,16,8], index: 1, kind: input, shape index: {}]
  %s2 = inlined_call_operand.vmem [shape: f32[2,32,16], index: 2, kind: input, shape index: {}]
  %s3 = inlined_call_operand.vmem [shape: f32[2,32,8], index: 3, kind: input, shape index: {}]
  %s4 = inlined_call_operand.vmem [shape: f32[2,16,2], index: 4, kind: input, shape index: {}]
  %s5 = inlined_call_operand.vmem [shape: f32[2,8,16], index: 5, kind: input, shape index: {}]
  %s6 = inlined_call_operand.vmem [shape: f32[2,8,1], index: 6, kind: input, shape index: {}]
  %s7 = inlined_call_operand.vmem [shape: f32[4,32,36], index: 7, kind: input, shape index: {}]
  %s8 = inlined_call_operand.vmem [shape: f32[4,1,32], index: 8, kind: input, shape index: {}]
  %s9 = inlined_call_operand.hbm [shape: f32[3,96,96], index: 9, kind: input, shape index: {}]
  %s10 = inlined_call_operand.vmem [shape: f32[3,1,96], index: 10, kind: input, shape index: {}]
  %s11 = inlined_call_operand.hbm [shape: f32[2,1,128], index: 11, kind: output, shape index: {}]
  %s12 = sld [smem:[#allocation0]]
  $region81: #{tpu_custom_call.1} parent=0
    _
  %s14 = ssub.s32 1, %s12
  %s15 = scalar_select 0, %s14, %s12
  $region1: #{tpu_custom_call.1} parent=0
    #allocation2 [shape = 'u8[147456]{0}', space=vmem, size = 0x24000, scoped, tag = 'input window, operand 9, single buffered']
    #allocation3 [shape = 's32[2]{0}', space=sflag, size = 0x8, scoped, tag = 'scoped memory for tpu_custom_call.1']
    #allocation4 [shape = 's32[2]{0}', space=sflag, size = 0x8, scoped, tag = 'scoped memory for tpu_custom_call.1']
    #allocation5 [shape = 'u8[1024]{0}', space=vmem, size = 0x400, scoped, tag = 'output window, operand 0']
    %16 = vsyncpa [#allocation3], 0
    %17 = vsyncpa [#allocation4], 0
    %s18 = scalar_lea.sflag [#allocation4], 1
    %19 = vsyncpa %s18, 0
    loop: start=0, step=1, limit=4
    $region2: #{tpu_custom_call.1} parent=1 // loop_pre_header
      _
    $region3: #{tpu_custom_call.1} parent=1 // loop_header
      %s21 = sphi 0, %s25
      %p22 = scmp.ge.s32.totalorder %s21, 4
      %s31 = sphi 0, %s33
      %s34 = sphi 0, %s31
      %s35 = sphi 0, %s34
      %s51 = sphi 0, %s35
      %s57 = sphi 0, %s59
      %s60 = sphi 0, %s57
      %s61 = sphi 0, %s60
      %s77 = sphi 0, %s61
      %s83 = sphi 0, %s85
      %s86 = sphi 0, %s83
      %s87 = sphi 0, %s86
      %s103 = sphi 0, %s87
      %s109 = sphi 0, %s111
      %s112 = sphi 0, %s109
      %s113 = sphi 0, %s112
      %s129 = sphi 0, %s113
      %s135 = sphi 0, %s137
      %s138 = sphi 0, %s135
      %s139 = sphi 0, %s138
      %s155 = sphi 0, %s139
      %s161 = sphi 0, %s163
      %s164 = sphi 0, %s161
      %s165 = sphi 0, %s164
      %s181 = sphi 0, %s165
      %s187 = sphi 0, %s189
      %s190 = sphi 0, %s187
      %s191 = sphi 0, %s190
      %s207 = sphi 0, %s191
      %s211 = sphi 0, %s211
      %s213 = sphi 0, %s211
      %s214 = sphi 0, %s213
      %s228 = sphi 0, %s214
      %s232 = sphi 0, %s232
      %s234 = sphi 0, %s232
      %s235 = sphi 0, %s234
      %s249 = sphi 0, %s235
      %s253 = sphi 0, %s253
      %s255 = sphi 0, %s253
      %s256 = sphi 0, %s255
      %s270 = sphi 0, %s256
      %s274 = sphi 0, %s274
      %s276 = sphi 0, %s274
      %s277 = sphi 0, %s276
      %s291 = sphi 0, %s277
      %s297 = sphi 0, %s299
      %s300 = sphi 0, %s297
      %s301 = sphi 0, %s300
      %s317 = sphi 0, %s301
    $region4: #{tpu_custom_call.1} parent=1 // loop_header_branch
      %24 = sbr.rel (%p22) target = $region8
    $region5: #{tpu_custom_call.1} parent=1 // loop_body
      %s26 = ssub.s32 %s21, 1
      %s27 = ssub.s32 %s21, 2
      %s28 = sadd.s32 %s21, 1
      %s29 = ssub.s32 %s21, %s28
      %p30 = scmp.eq.s32.totalorder %s29, 0
      %s32 = sadd.s32 %s31, 1
      %s33 = scalar_select %p30, %s31, %s32
      %p36 = pneg %p30
      %p37 = scmp.eq.s32.totalorder %s21, 1
      %p38 = por %p36, %p37
      %p39 = scmp.ne.s32.totalorder %s31, %s34
      %p40 = scmp.eq.s32.totalorder %s21, 0
      %p41 = por %p39, %p40
      %p42 = scmp.ne.s32.totalorder %s31, %s34
      %p43 = scmp.eq.s32.totalorder %s26, 1
      %p44 = por %p42, %p43
      %p45 = scmp.ne.s32.totalorder %s34, %s35
      %p46 = scmp.eq.s32.totalorder %s26, 0
      %p47 = por %p45, %p46
      %p48 = scmp.ne.s32.totalorder %s34, %s35
      %p49 = scmp.eq.s32.totalorder %s27, 1
      %p50 = por %p48, %p49
      %p52 = scmp.ne.s32.totalorder %s35, %s51
      %p53 = scmp.eq.s32.totalorder %s27, 0
      %p54 = por %p52, %p53
      %s55 = ssub.s32 %s21, %s28
      %p56 = scmp.eq.s32.totalorder %s55, 0
      %s58 = sadd.s32 %s57, 1
      %s59 = scalar_select %p56, %s57, %s58
      %p62 = pneg %p56
      %p63 = scmp.eq.s32.totalorder %s21, 1
      %p64 = por %p62, %p63
      %p65 = scmp.ne.s32.totalorder %s57, %s60
      %p66 = scmp.eq.s32.totalorder %s21, 0
      %p67 = por %p65, %p66
      %p68 = scmp.ne.s32.totalorder %s57, %s60
      %p69 = scmp.eq.s32.totalorder %s26, 1
      %p70 = por %p68, %p69
      %p71 = scmp.ne.s32.totalorder %s60, %s61
      %p72 = scmp.eq.s32.totalorder %s26, 0
      %p73 = por %p71, %p72
      %p74 = scmp.ne.s32.totalorder %s60, %s61
      %p75 = scmp.eq.s32.totalorder %s27, 1
      %p76 = por %p74, %p75
      %p78 = scmp.ne.s32.totalorder %s61, %s77
      %p79 = scmp.eq.s32.totalorder %s27, 0
      %p80 = por %p78, %p79
      %s81 = ssub.s32 %s21, %s28
      %p82 = scmp.eq.s32.totalorder %s81, 0
      %s84 = sadd.s32 %s83, 1
      %s85 = scalar_select %p82, %s83, %s84
      %p88 = pneg %p82
      %p89 = scmp.eq.s32.totalorder %s21, 1
      %p90 = por %p88, %p89
      %p91 = scmp.ne.s32.totalorder %s83, %s86
      %p92 = scmp.eq.s32.totalorder %s21, 0
      %p93 = por %p91, %p92
      %p94 = scmp.ne.s32.totalorder %s83, %s86
      %p95 = scmp.eq.s32.totalorder %s26, 1
      %p96 = por %p94, %p95
      %p97 = scmp.ne.s32.totalorder %s86, %s87
      %p98 = scmp.eq.s32.totalorder %s26, 0
      %p99 = por %p97, %p98
      %p100 = scmp.ne.s32.totalorder %s86, %s87
      %p101 = scmp.eq.s32.totalorder %s27, 1
      %p102 = por %p100, %p101
      %p104 = scmp.ne.s32.totalorder %s87, %s103
      %p105 = scmp.eq.s32.totalorder %s27, 0
      %p106 = por %p104, %p105
      %s107 = ssub.s32 %s21, %s28
      %p108 = scmp.eq.s32.totalorder %s107, 0
      %s110 = sadd.s32 %s109, 1
      %s111 = scalar_select %p108, %s109, %s110
      %p114 = pneg %p108
      %p115 = scmp.eq.s32.totalorder %s21, 1
      %p116 = por %p114, %p115
      %p117 = scmp.ne.s32.totalorder %s109, %s112
      %p118 = scmp.eq.s32.totalorder %s21, 0
      %p119 = por %p117, %p118
      %p120 = scmp.ne.s32.totalorder %s109, %s112
      %p121 = scmp.eq.s32.totalorder %s26, 1
      %p122 = por %p120, %p121
      %p123 = scmp.ne.s32.totalorder %s112, %s113
      %p124 = scmp.eq.s32.totalorder %s26, 0
      %p125 = por %p123, %p124
      %p126 = scmp.ne.s32.totalorder %s112, %s113
      %p127 = scmp.eq.s32.totalorder %s27, 1
      %p128 = por %p126, %p127
      %p130 = scmp.ne.s32.totalorder %s113, %s129
      %p131 = scmp.eq.s32.totalorder %s27, 0
      %p132 = por %p130, %p131
      %s133 = ssub.s32 %s21, %s28
      %p134 = scmp.eq.s32.totalorder %s133, 0
      %s136 = sadd.s32 %s135, 1
      %s137 = scalar_select %p134, %s135, %s136
      %p140 = pneg %p134
      %p141 = scmp.eq.s32.totalorder %s21, 1
      %p142 = por %p140, %p141
      %p143 = scmp.ne.s32.totalorder %s135, %s138
      %p144 = scmp.eq.s32.totalorder %s21, 0
      %p145 = por %p143, %p144
      %p146 = scmp.ne.s32.totalorder %s135, %s138
      %p147 = scmp.eq.s32.totalorder %s26, 1
      %p148 = por %p146, %p147
      %p149 = scmp.ne.s32.totalorder %s138, %s139
      %p150 = scmp.eq.s32.totalorder %s26, 0
      %p151 = por %p149, %p150
      %p152 = scmp.ne.s32.totalorder %s138, %s139
      %p153 = scmp.eq.s32.totalorder %s27, 1
      %p154 = por %p152, %p153
      %p156 = scmp.ne.s32.totalorder %s139, %s155
      %p157 = scmp.eq.s32.totalorder %s27, 0
      %p158 = por %p156, %p157
      %s159 = ssub.s32 %s21, %s28
      %p160 = scmp.eq.s32.totalorder %s159, 0
      %s162 = sadd.s32 %s161, 1
      %s163 = scalar_select %p160, %s161, %s162
      %p166 = pneg %p160
      %p167 = scmp.eq.s32.totalorder %s21, 1
      %p168 = por %p166, %p167
      %p169 = scmp.ne.s32.totalorder %s161, %s164
      %p170 = scmp.eq.s32.totalorder %s21, 0
      %p171 = por %p169, %p170
      %p172 = scmp.ne.s32.totalorder %s161, %s164
      %p173 = scmp.eq.s32.totalorder %s26, 1
      %p174 = por %p172, %p173
      %p175 = scmp.ne.s32.totalorder %s164, %s165
      %p176 = scmp.eq.s32.totalorder %s26, 0
      %p177 = por %p175, %p176
      %p178 = scmp.ne.s32.totalorder %s164, %s165
      %p179 = scmp.eq.s32.totalorder %s27, 1
      %p180 = por %p178, %p179
      %p182 = scmp.ne.s32.totalorder %s165, %s181
      %p183 = scmp.eq.s32.totalorder %s27, 0
      %p184 = por %p182, %p183
      %s185 = ssub.s32 %s21, %s28
      %p186 = scmp.eq.s32.totalorder %s185, 0
      %s188 = sadd.s32 %s187, 1
      %s189 = scalar_select %p186, %s187, %s188
      %p192 = pneg %p186
      %p193 = scmp.eq.s32.totalorder %s21, 1
      %p194 = por %p192, %p193
      %p195 = scmp.ne.s32.totalorder %s187, %s190
      %p196 = scmp.eq.s32.totalorder %s21, 0
      %p197 = por %p195, %p196
      %p198 = scmp.ne.s32.totalorder %s187, %s190
      %p199 = scmp.eq.s32.totalorder %s26, 1
      %p200 = por %p198, %p199
      %p201 = scmp.ne.s32.totalorder %s190, %s191
      %p202 = scmp.eq.s32.totalorder %s26, 0
      %p203 = por %p201, %p202
      %p204 = scmp.ne.s32.totalorder %s190, %s191
      %p205 = scmp.eq.s32.totalorder %s27, 1
      %p206 = por %p204, %p205
      %p208 = scmp.ne.s32.totalorder %s191, %s207
      %p209 = scmp.eq.s32.totalorder %s27, 0
      %p210 = por %p208, %p209
      %s212 = sadd.s32 %s211, 1
      %p215 = scmp.eq.s32.totalorder %s21, 1
      %p216 = scmp.ne.s32.totalorder %s211, %s213
      %p217 = scmp.eq.s32.totalorder %s21, 0
      %p218 = por %p216, %p217
      %p219 = scmp.ne.s32.totalorder %s211, %s213
      %p220 = scmp.eq.s32.totalorder %s26, 1
      %p221 = por %p219, %p220
      %p222 = scmp.ne.s32.totalorder %s213, %s214
      %p223 = scmp.eq.s32.totalorder %s26, 0
      %p224 = por %p222, %p223
      %p225 = scmp.ne.s32.totalorder %s213, %s214
      %p226 = scmp.eq.s32.totalorder %s27, 1
      %p227 = por %p225, %p226
      %p229 = scmp.ne.s32.totalorder %s214, %s228
      %p230 = scmp.eq.s32.totalorder %s27, 0
      %p231 = por %p229, %p230
      %s233 = sadd.s32 %s232, 1
      %p236 = scmp.eq.s32.totalorder %s21, 1
      %p237 = scmp.ne.s32.totalorder %s232, %s234
      %p238 = scmp.eq.s32.totalorder %s21, 0
      %p239 = por %p237, %p238
      %p240 = scmp.ne.s32.totalorder %s232, %s234
      %p241 = scmp.eq.s32.totalorder %s26, 1
      %p242 = por %p240, %p241
      %p243 = scmp.ne.s32.totalorder %s234, %s235
      %p244 = scmp.eq.s32.totalorder %s26, 0
      %p245 = por %p243, %p244
      %p246 = scmp.ne.s32.totalorder %s234, %s235
      %p247 = scmp.eq.s32.totalorder %s27, 1
      %p248 = por %p246, %p247
      %p250 = scmp.ne.s32.totalorder %s235, %s249
      %p251 = scmp.eq.s32.totalorder %s27, 0
      %p252 = por %p250, %p251
      %s254 = sadd.s32 %s253, 1
      %p257 = scmp.eq.s32.totalorder %s21, 1
      %p258 = scmp.ne.s32.totalorder %s253, %s255
      %p259 = scmp.eq.s32.totalorder %s21, 0
      %p260 = por %p258, %p259
      %p261 = scmp.ne.s32.totalorder %s253, %s255
      %p262 = scmp.eq.s32.totalorder %s26, 1
      %p263 = por %p261, %p262
      %p264 = scmp.ne.s32.totalorder %s255, %s256
      %p265 = scmp.eq.s32.totalorder %s26, 0
      %p266 = por %p264, %p265
      %p267 = scmp.ne.s32.totalorder %s255, %s256
      %p268 = scmp.eq.s32.totalorder %s27, 1
      %p269 = por %p267, %p268
      %p271 = scmp.ne.s32.totalorder %s256, %s270
      %p272 = scmp.eq.s32.totalorder %s27, 0
      %p273 = por %p271, %p272
      %s275 = sadd.s32 %s274, 1
      %p278 = scmp.eq.s32.totalorder %s21, 1
      %p279 = scmp.ne.s32.totalorder %s274, %s276
      %p280 = scmp.eq.s32.totalorder %s21, 0
      %p281 = por %p279, %p280
      %p282 = scmp.ne.s32.totalorder %s274, %s276
      %p283 = scmp.eq.s32.totalorder %s26, 1
      %p284 = por %p282, %p283
      %p285 = scmp.ne.s32.totalorder %s276, %s277
      %p286 = scmp.eq.s32.totalorder %s26, 0
      %p287 = por %p285, %p286
      %p288 = scmp.ne.s32.totalorder %s276, %s277
      %p289 = scmp.eq.s32.totalorder %s27, 1
      %p290 = por %p288, %p289
      %p292 = scmp.ne.s32.totalorder %s277, %s291
      %p293 = scmp.eq.s32.totalorder %s27, 0
      %p294 = por %p292, %p293
      %s295 = ssub.s32 %s21, %s28
      %p296 = scmp.eq.s32.totalorder %s295, 0
      %s298 = sadd.s32 %s297, 1
      %s299 = scalar_select %p296, %s297, %s298
      %p302 = pneg %p296
      %p303 = scmp.eq.s32.totalorder %s21, 1
      %p304 = por %p302, %p303
      %p305 = scmp.ne.s32.totalorder %s297, %s300
      %p306 = scmp.eq.s32.totalorder %s21, 0
      %p307 = por %p305, %p306
      %p308 = scmp.ne.s32.totalorder %s297, %s300
      %p309 = scmp.eq.s32.totalorder %s26, 1
      %p310 = por %p308, %p309
      %p311 = scmp.ne.s32.totalorder %s300, %s301
      %p312 = scmp.eq.s32.totalorder %s26, 0
      %p313 = por %p311, %p312
      %p314 = scmp.ne.s32.totalorder %s300, %s301
      %p315 = scmp.eq.s32.totalorder %s27, 1
      %p316 = por %p314, %p315
      %p318 = scmp.ne.s32.totalorder %s301, %s317
      %p319 = scmp.eq.s32.totalorder %s27, 0
      %p320 = por %p318, %p319
      %p321 = scmp.le.s32.totalorder 1, %s21
      %p322 = scmp.lt.s32.totalorder %s21, 3
      %p323 = pnand %p321, %p322
      %p324 = pneg %p323
      // Predicated region
      $region9: #{tpu_custom_call.1} parent=5 // pred_check
        _
      $region10: #{tpu_custom_call.1} parent=5 // pred_check_branch
        %326 = sbr.rel (%p323) target = $region12
      $region11: #{tpu_custom_call.1} parent=5 // pred_region
        %s327 = ssub.s32 %s21, 1
        // Predicated region
        $region13: #{tpu_custom_call.1} parent=11 // pred_check
          %p328 = pneg %p224
        $region14: #{tpu_custom_call.1} parent=11 // pred_check_branch
          %330 = sbr.rel (%p328) target = $region16
        $region15: #{tpu_custom_call.1} parent=11 // pred_region
          _
        $region16: #{tpu_custom_call.1} parent=11 // pred_fallthru
          _
        // Predicated region
        $region17: #{tpu_custom_call.1} parent=11 // pred_check
          %p331 = pneg %p245
        $region18: #{tpu_custom_call.1} parent=11 // pred_check_branch
          %333 = sbr.rel (%p331) target = $region20
        $region19: #{tpu_custom_call.1} parent=11 // pred_region
          _
        $region20: #{tpu_custom_call.1} parent=11 // pred_fallthru
          _
        // Predicated region
        $region21: #{tpu_custom_call.1} parent=11 // pred_check
          %p334 = pneg %p266
        $region22: #{tpu_custom_call.1} parent=11 // pred_check_branch
          %336 = sbr.rel (%p334) target = $region24
        $region23: #{tpu_custom_call.1} parent=11 // pred_region
          %338 = vsyncadd [#allocation3], 0
          %s339 = sshll.u32 %s9, 4
          %s340 = int_to_ptr.hbm [resolvable:$true] %s339
          %s341 = sshll.u32 [#allocation2], 4
          %s342 = int_to_ptr.vmem [resolvable:$true] %s341
          %347 = dma.hbm_to_vmem [thread:$0]  %s340, 4608, %s342, [#allocation3], 128, 128, 8
        $region24: #{tpu_custom_call.1} parent=11 // pred_fallthru
          _
        // Predicated region
        $region25: #{tpu_custom_call.1} parent=11 // pred_check
          %p348 = pneg %p287
        $region26: #{tpu_custom_call.1} parent=11 // pred_check_branch
          %350 = sbr.rel (%p348) target = $region28
        $region27: #{tpu_custom_call.1} parent=11 // pred_region
          _
        $region28: #{tpu_custom_call.1} parent=11 // pred_fallthru
          _
      $region12: #{tpu_custom_call.1} parent=5 // pred_fallthru
        _
      %p351 = scmp.lt.s32.totalorder %s21, 2
      // Predicated region
      $region29: #{tpu_custom_call.1} parent=5 // pred_check
        %p352 = pneg %p351
      $region30: #{tpu_custom_call.1} parent=5 // pred_check_branch
        %354 = sbr.rel (%p352) target = $region32
      $region31: #{tpu_custom_call.1} parent=5 // pred_region
        // Predicated region
        $region33: #{tpu_custom_call.1} parent=31 // pred_check
          %p355 = pneg %p41
        $region34: #{tpu_custom_call.1} parent=31 // pred_check_branch
          %357 = sbr.rel (%p355) target = $region36
        $region35: #{tpu_custom_call.1} parent=31 // pred_region
          %p358 = scmp.lt.s32.totalorder %s21, 1
          %s359 = scalar_select %p358, %s21, 1
          %s360 = smul.addr %s359, 8
          %s361 = scalar_lea.vmem %s0, %s360
        $region36: #{tpu_custom_call.1} parent=31 // pred_fallthru
          _
        // Predicated region
        $region37: #{tpu_custom_call.1} parent=31 // pred_check
          %p362 = pneg %p67
        $region38: #{tpu_custom_call.1} parent=31 // pred_check_branch
          %364 = sbr.rel (%p362) target = $region40
        $region39: #{tpu_custom_call.1} parent=31 // pred_region
          %p365 = scmp.lt.s32.totalorder %s21, 1
          %s366 = scalar_select %p365, %s21, 1
          %s367 = smul.addr %s366, 2
          %s368 = smul.addr %s367, 8
          %s369 = scalar_lea.vmem %s1, %s368
        $region40: #{tpu_custom_call.1} parent=31 // pred_fallthru
          _
        // Predicated region
        $region41: #{tpu_custom_call.1} parent=31 // pred_check
          %p370 = pneg %p93
        $region42: #{tpu_custom_call.1} parent=31 // pred_check_branch
          %372 = sbr.rel (%p370) target = $region44
        $region43: #{tpu_custom_call.1} parent=31 // pred_region
          %p373 = scmp.lt.s32.totalorder %s21, 1
          %s374 = scalar_select %p373, %s21, 1
          %s375 = smul.addr %s374, 4
          %s376 = smul.addr %s375, 8
          %s377 = scalar_lea.vmem %s2, %s376
        $region44: #{tpu_custom_call.1} parent=31 // pred_fallthru
          _
        // Predicated region
        $region45: #{tpu_custom_call.1} parent=31 // pred_check
          %p378 = pneg %p119
        $region46: #{tpu_custom_call.1} parent=31 // pred_check_branch
          %380 = sbr.rel (%p378) target = $region48
        $region47: #{tpu_custom_call.1} parent=31 // pred_region
          %p381 = scmp.lt.s32.totalorder %s21, 1
          %s382 = scalar_select %p381, %s21, 1
          %s383 = smul.addr %s382, 4
          %s384 = smul.addr %s383, 8
          %s385 = scalar_lea.vmem %s3, %s384
        $region48: #{tpu_custom_call.1} parent=31 // pred_fallthru
          _
        // Predicated region
        $region49: #{tpu_custom_call.1} parent=31 // pred_check
          %p386 = pneg %p145
        $region50: #{tpu_custom_call.1} parent=31 // pred_check_branch
          %388 = sbr.rel (%p386) target = $region52
        $region51: #{tpu_custom_call.1} parent=31 // pred_region
          %p389 = scmp.lt.s32.totalorder %s21, 1
          %s390 = scalar_select %p389, %s21, 1
          %s391 = smul.addr %s390, 2
          %s392 = smul.addr %s391, 8
          %s393 = scalar_lea.vmem %s4, %s392
        $region52: #{tpu_custom_call.1} parent=31 // pred_fallthru
          _
        // Predicated region
        $region53: #{tpu_custom_call.1} parent=31 // pred_check
          %p394 = pneg %p171
        $region54: #{tpu_custom_call.1} parent=31 // pred_check_branch
          %396 = sbr.rel (%p394) target = $region56
        $region55: #{tpu_custom_call.1} parent=31 // pred_region
          %p397 = scmp.lt.s32.totalorder %s21, 1
          %s398 = scalar_select %p397, %s21, 1
          %s399 = smul.addr %s398, 8
          %s400 = scalar_lea.vmem %s5, %s399
        $region56: #{tpu_custom_call.1} parent=31 // pred_fallthru
          _
        // Predicated region
        $region57: #{tpu_custom_call.1} parent=31 // pred_check
          %p401 = pneg %p197
        $region58: #{tpu_custom_call.1} parent=31 // pred_check_branch
          %403 = sbr.rel (%p401) target = $region60
        $region59: #{tpu_custom_call.1} parent=31 // pred_region
          %p404 = scmp.lt.s32.totalorder %s21, 1
          %s405 = scalar_select %p404, %s21, 1
          %s406 = smul.addr %s405, 8
          %s407 = scalar_lea.vmem %s6, %s406
        $region60: #{tpu_custom_call.1} parent=31 // pred_fallthru
          _
      $region32: #{tpu_custom_call.1} parent=5 // pred_fallthru
        _
      %p408 = scmp.le.s32.totalorder 1, %s21
      %p409 = scmp.lt.s32.totalorder %s21, 3
      %p410 = pnand %p408, %p409
      %p411 = pneg %p410
      // Predicated region
      $region61: #{tpu_custom_call.1} parent=5 // pred_check
        _
      $region62: #{tpu_custom_call.1} parent=5 // pred_check_branch
        %413 = sbr.rel (%p410) target = $region64
      $region63: #{tpu_custom_call.1} parent=5 // pred_region
        %s414 = ssub.s32 %s21, 1
        // Predicated region
        $region65: #{tpu_custom_call.1} parent=63 // pred_check
          %p415 = pneg %p266
        $region66: #{tpu_custom_call.1} parent=63 // pred_check_branch
          %417 = sbr.rel (%p415) target = $region68
        $region67: #{tpu_custom_call.1} parent=63 // pred_region
          %419 = dma.done [#allocation3], 4608
        $region68: #{tpu_custom_call.1} parent=63 // pred_fallthru
          _
        %p420 = scmp.lt.s32.totalorder %s26, 1
        %s421 = scalar_select %p420, %s26, 1
        %s422 = smul.addr %s421, 8
        %s423 = scalar_lea.vmem %s0, %s422
        %p424 = pneg %p47
        %p425 = pneg %p44
        %p426 = scmp.lt.s32.totalorder %s26, 1
        %s427 = scalar_select %p426, %s26, 1
        %s428 = smul.addr %s427, 2
        %s429 = smul.addr %s428, 8
        %s430 = scalar_lea.vmem %s1, %s429
        %p431 = pneg %p73
        %p432 = pneg %p70
        %p433 = scmp.lt.s32.totalorder %s26, 1
        %s434 = scalar_select %p433, %s26, 1
        %s435 = smul.addr %s434, 4
        %s436 = smul.addr %s435, 8
        %s437 = scalar_lea.vmem %s2, %s436
        %p438 = pneg %p99
        %p439 = pneg %p96
        %p440 = scmp.lt.s32.totalorder %s26, 1
        %s441 = scalar_select %p440, %s26, 1
        %s442 = smul.addr %s441, 4
        %s443 = smul.addr %s442, 8
        %s444 = scalar_lea.vmem %s3, %s443
        %p445 = pneg %p125
        %p446 = pneg %p122
        %p447 = scmp.lt.s32.totalorder %s26, 1
        %s448 = scalar_select %p447, %s26, 1
        %s449 = smul.addr %s448, 2
        %s450 = smul.addr %s449, 8
        %s451 = scalar_lea.vmem %s4, %s450
        %p452 = pneg %p151
        %p453 = pneg %p148
        %p454 = scmp.lt.s32.totalorder %s26, 1
        %s455 = scalar_select %p454, %s26, 1
        %s456 = smul.addr %s455, 8
        %s457 = scalar_lea.vmem %s5, %s456
        %p458 = pneg %p177
        %p459 = pneg %p174
        %p460 = scmp.lt.s32.totalorder %s26, 1
        %s461 = scalar_select %p460, %s26, 1
        %s462 = smul.addr %s461, 8
        %s463 = scalar_lea.vmem %s6, %s462
        %p464 = pneg %p203
        %p465 = pneg %p200
        %p466 = pneg %p224
        %p467 = pneg %p221
        %p468 = pneg %p245
        %p469 = pneg %p242
        %p470 = pneg %p266
        %p471 = pneg %p263
        %p472 = pneg %p287
        %p473 = pneg %p284
        %p474 = pneg %p313
        %p475 = pneg %p310
        %s476 = sand.u32 %s300, 1
        %s477 = scalar_lea.sflag [#allocation4], %s476
        %s478 = sand.u32 %s300, 1
        %s479 = scalar_lea.vmem [#allocation5], %s478
        %p480 = scmp.lt.s32.totalorder %s26, 1
        %s481 = scalar_select %p480, %s26, 1
        %s482 = smul.addr %s481, 8
        %s483 = scalar_lea.vmem %s0, %s482
        %p484 = scmp.lt.s32.totalorder %s26, 1
        %s485 = scalar_select %p484, %s26, 1
        %s486 = smul.addr %s485, 2
        %s487 = smul.addr %s486, 8
        %s488 = scalar_lea.vmem %s1, %s487
        %p489 = scmp.lt.s32.totalorder %s26, 1
        %s490 = scalar_select %p489, %s26, 1
        %s491 = smul.addr %s490, 4
        %s492 = smul.addr %s491, 8
        %s493 = scalar_lea.vmem %s2, %s492
        %p494 = scmp.lt.s32.totalorder %s26, 1
        %s495 = scalar_select %p494, %s26, 1
        %s496 = smul.addr %s495, 4
        %s497 = smul.addr %s496, 8
        %s498 = scalar_lea.vmem %s3, %s497
        %p499 = scmp.lt.s32.totalorder %s26, 1
        %s500 = scalar_select %p499, %s26, 1
        %s501 = smul.addr %s500, 2
        %s502 = smul.addr %s501, 8
        %s503 = scalar_lea.vmem %s4, %s502
        %p504 = scmp.lt.s32.totalorder %s26, 1
        %s505 = scalar_select %p504, %s26, 1
        %s506 = smul.addr %s505, 8
        %s507 = scalar_lea.vmem %s5, %s506
        %p508 = scmp.lt.s32.totalorder %s26, 1
        %s509 = scalar_select %p508, %s26, 1
        %s510 = smul.addr %s509, 8
        %s511 = scalar_lea.vmem %s6, %s510
        %v512 = vlaneseq
        %v513 = vand.u32 %v512, 127
        %vm514 = vcmp.ge.s32.totalorder %v513, 0
        %vm515 = vcmp.lt.s32.totalorder %v513, 16
        %vm516 = vmand %vm514, %vm515
        %v517 = vsel %vm516, 1, 0
        %v518 = vcvt.s32.f32 %v517
        %vm519 = vcmp.ge.s32.totalorder %v513, 16
        %vm520 = vcmp.lt.s32.totalorder %v513, 32
        %vm521 = vmand %vm519, %vm520
        %v522 = vsel %vm521, 1, 0
        %v523 = vcvt.s32.f32 %v522
        %v524 = vld [vmem:[%s483] sm:$0xff]
        %v525 = vld [vmem:[%s488] sm:$0xff]
        %v526 = vld [vmem:[%s488 + $0x8] sm:$0xff]
        %v527 = vld [vmem:[%s7] sm:$0xff]
        %v528 = vld [vmem:[%s7 + $0x8] sm:$0xff]
        %v529 = vld [vmem:[%s7 + $0x10] sm:$0xff]
        %v530 = vld [vmem:[%s7 + $0x18] sm:$0xff]
        %vm531 = vcmask 261120
        %v533 = vsel %vm531, %v524, 0
        %535 = vmatpush.msra.mxu0 0.0
        %536 = vmatpush.msra.mxu0 0.0
        %537 = vmatpush.msra.mxu0 0.0
        %538 = vmatpush.msra.mxu0 0.0
        %539 = vmatpush.msra.mxu0 0.0
        %540 = vmatpush.msra.mxu0 0.0
        %541 = vmatpush.msra.mxu0 0.0
        %542 = vmatpush.msra.mxu0 0.0
        %543 = vmatpush.msra.mxu0 0.0
        %544 = vmatpush.msra.mxu0 0.0
        %545 = vmatpush.msra.mxu0 0.0
        %546 = vmatpush.msra.mxu0 0.0
        %547 = vmatpush.msra.mxu0 %v530
        %548 = vmatpush.msra.mxu0 %v529
        %549 = vmatpush.msra.mxu0 %v528
        %550 = vmatpush.msra.mxu0 %v527
        %551 = vmatmul.f32.gmra.mxu0 %v533
        %v552 = vpop.f32.mrf.mxu0
        %v553 = vadd.f32 0.0, %v552
        %554 = vdwg.mxu0
        %556 = vrot.lane.b32.xlu0 %v553, 94
        %v557 = vpop.permute.xlu0 %556
        %559 = vxpose.xlu0.b32.start [1/16] %v557, 128
        %560 = vxpose.xlu0.b32.cont [2/16] 0.0, 128
        %561 = vxpose.xlu0.b32.cont [3/16] 0.0, 128
        %562 = vxpose.xlu0.b32.cont [4/16] 0.0, 128
        %563 = vxpose.xlu0.b32.cont [5/16] 0.0, 128
        %564 = vxpose.xlu0.b32.cont [6/16] 0.0, 128
        %565 = vxpose.xlu0.b32.cont [7/16] 0.0, 128
        %566 = vxpose.xlu0.b32.cont [8/16] 0.0, 128
        %567 = vxpose.xlu0.b32.cont [9/16] 0.0, 128
        %568 = vxpose.xlu0.b32.cont [10/16] 0.0, 128
        %569 = vxpose.xlu0.b32.cont [11/16] 0.0, 128
        %570 = vxpose.xlu0.b32.cont [12/16] 0.0, 128
        %571 = vxpose.xlu0.b32.cont [13/16] 0.0, 128
        %572 = vxpose.xlu0.b32.cont [14/16] 0.0, 128
        %573 = vxpose.xlu0.b32.cont [15/16] 0.0, 128
        %574 = vxpose.xlu0.b32.end [16/16] 0.0, 128
        %v575 = vpop.trf.xlu0
        %v576 = vpop.trf.xlu0
        %v577 = vpop.trf.xlu0
        %v578 = vpop.trf.xlu0
        %v579 = vpop.trf.xlu0
        %v580 = vpop.trf.xlu0
        %v581 = vpop.trf.xlu0
        %v582 = vpop.trf.xlu0
        %v583 = vpop.trf.xlu0
        %v584 = vpop.trf.xlu0
        %v585 = vpop.trf.xlu0
        %v586 = vpop.trf.xlu0
        %v587 = vpop.trf.xlu0
        %v588 = vpop.trf.xlu0
        %v589 = vpop.trf.xlu0
        %v590 = vpop.trf.xlu0
        %591 = vset.pattern.permute.xlu0 32
        %592 = vperm.xlu0 %591, %v553
        %v593 = vpop.permute.xlu0 %592
        %v595 = vperm.slane %v575, 0
        %v596 = vadd.f32 %v593, %v595
        %597 = vset.pattern.permute.xlu0 33
        %598 = vperm.xlu0 %597, %v553
        %v599 = vpop.permute.xlu0 %598
        %v601 = vperm.slane %v575, 1
        %v602 = vadd.f32 %v599, %v601
        %vm603 = vcmp.gt.f32.partialorder %v596, 0.0
        %vm604 = vcmp.gt.f32.partialorder %v602, 0.0
        %v605 = vmul.f32 %v596, 0.2
        %v606 = vmul.f32 %v602, 0.2
        %v607 = vsel %vm603, %v596, %v605
        %v608 = vsel %vm604, %v602, %v606
        %v609 = vadd.f32 %v607, %v525
        %v610 = vadd.f32 %v608, %v526
        %vm611 = vcmask 64512
        %v612 = vsel %vm611, %v609, -inf
        %613 = vmax.xlane.f32.xlu0 %v612
        %v614 = vpop.xlane.xlu0 %613
        %v615 = vsel %vm611, %v610, -inf
        %616 = vmax.xlane.f32.xlu0 %v615
        %v617 = vpop.xlane.xlu0 %616
        %v618 = vsub.f32 %v609, %v614
        %v619 = vsub.f32 %v610, %v617
        %v620 = vmul.f32 %v618, 1.442695
        %v621 = vpow.pop %v620
        %v622 = vmul.f32 %v619, 1.442695
        %v623 = vpow.pop %v622
        %v624 = vsel %vm611, %v621, 0.0
        %625 = vadd.xlane.f32.xlu0 %v624
        %v626 = vpop.xlane.xlu0 %625
        %v627 = vsel %vm611, %v623, 0.0
        %628 = vadd.xlane.f32.xlu0 %v627
        %v629 = vpop.xlane.xlu0 %628
        %v630 = vmax.f32 %v626, 1e-16
        %v631 = vmax.f32 %v629, 1e-16
        %v632 = vrcp.pop %v630
        %v633 = vrcp.pop %v631
        %v634 = vmul.f32 %v621, %v632
        %v635 = vmul.f32 %v623, %v633
        %v636 = vmul.f32 %v553, %v518
        %v637 = vmul.f32 %v553, %v523
        %v639 = vsel %vm611, %v635, 0
        %641 = vmatpush.msra.mxu0 0.0
        %642 = vmatpush.msra.mxu0 0.0
        %643 = vmatpush.msra.mxu0 0.0
        %644 = vmatpush.msra.mxu0 0.0
        %645 = vmatpush.msra.mxu0 0.0
        %646 = vmatpush.msra.mxu0 0.0
        %647 = vmatpush.msra.mxu0 0.0
        %648 = vmatpush.msra.mxu0 0.0
        %649 = vmatpush.msra.mxu0 0.0
        %650 = vmatpush.msra.mxu0 0.0
        %651 = vmatpush.msra.mxu0 0.0
        %652 = vmatpush.msra.mxu0 0.0
        %653 = vmatpush.msra.mxu0 0.0
        %654 = vmatpush.msra.mxu0 0.0
        %655 = vmatpush.msra.mxu0 0.0
        %656 = vmatpush.msra.mxu0 %v637
        %657 = vmatmul.f32.gmra.mxu0 %v639
        %v658 = vpop.f32.mrf.mxu0
        %v659 = vadd.f32 0.0, %v658
        %660 = vdwg.mxu0
        %v662 = vsel %vm611, %v634, 0
        %664 = vmatpush.msra.mxu0 0.0
        %665 = vmatpush.msra.mxu0 0.0
        %666 = vmatpush.msra.mxu0 0.0
        %667 = vmatpush.msra.mxu0 0.0
        %668 = vmatpush.msra.mxu0 0.0
        %669 = vmatpush.msra.mxu0 0.0
        %670 = vmatpush.msra.mxu0 0.0
        %671 = vmatpush.msra.mxu0 0.0
        %672 = vmatpush.msra.mxu0 0.0
        %673 = vmatpush.msra.mxu0 0.0
        %674 = vmatpush.msra.mxu0 0.0
        %675 = vmatpush.msra.mxu0 0.0
        %676 = vmatpush.msra.mxu0 0.0
        %677 = vmatpush.msra.mxu0 0.0
        %678 = vmatpush.msra.mxu0 0.0
        %679 = vmatpush.msra.mxu0 %v636
        %680 = vmatmul.f32.gmra.mxu0 %v662
        %v681 = vpop.f32.mrf.mxu0
        %v682 = vadd.f32 %v659, %v681
        %683 = vdwg.mxu0
        %v684 = vld [vmem:[%s8] sm:$0x1]
        %v686 = vperm.slane %v684, 0
        %v688 = vadd.f32 %v682, %v686
        %v689 = vmax.f32 %v688, 0.0
        %s690 = scalar_lea.vmem %s7, 32
        %v691 = vld [vmem:[%s690] sm:$0xff]
        %v692 = vld [vmem:[%s690 + $0x8] sm:$0xff]
        %v693 = vld [vmem:[%s690 + $0x10] sm:$0xff]
        %v694 = vld [vmem:[%s690 + $0x18] sm:$0xff]
        %v696 = vsel %vm531, %v689, 0
        %698 = vmatpush.msra.mxu0 0.0
        %699 = vmatpush.msra.mxu0 0.0
        %700 = vmatpush.msra.mxu0 0.0
        %701 = vmatpush.msra.mxu0 0.0
        %702 = vmatpush.msra.mxu0 0.0
        %703 = vmatpush.msra.mxu0 0.0
        %704 = vmatpush.msra.mxu0 0.0
        %705 = vmatpush.msra.mxu0 0.0
        %706 = vmatpush.msra.mxu0 0.0
        %707 = vmatpush.msra.mxu0 0.0
        %708 = vmatpush.msra.mxu0 0.0
        %709 = vmatpush.msra.mxu0 0.0
        %710 = vmatpush.msra.mxu0 %v694
        %711 = vmatpush.msra.mxu0 %v693
        %712 = vmatpush.msra.mxu0 %v692
        %713 = vmatpush.msra.mxu0 %v691
        %714 = vmatmul.f32.gmra.mxu0 %v696
        %v715 = vpop.f32.mrf.mxu0
        %v716 = vadd.f32 0.0, %v715
        %717 = vdwg.mxu0
        %719 = vrot.lane.b32.xlu0 %v716, 94
        %v720 = vpop.permute.xlu0 %719
        %722 = vxpose.xlu0.b32.start [1/16] %v720, 128
        %723 = vxpose.xlu0.b32.cont [2/16] 0.0, 128
        %724 = vxpose.xlu0.b32.cont [3/16] 0.0, 128
        %725 = vxpose.xlu0.b32.cont [4/16] 0.0, 128
        %726 = vxpose.xlu0.b32.cont [5/16] 0.0, 128
        %727 = vxpose.xlu0.b32.cont [6/16] 0.0, 128
        %728 = vxpose.xlu0.b32.cont [7/16] 0.0, 128
        %729 = vxpose.xlu0.b32.cont [8/16] 0.0, 128
        %730 = vxpose.xlu0.b32.cont [9/16] 0.0, 128
        %731 = vxpose.xlu0.b32.cont [10/16] 0.0, 128
        %732 = vxpose.xlu0.b32.cont [11/16] 0.0, 128
        %733 = vxpose.xlu0.b32.cont [12/16] 0.0, 128
        %734 = vxpose.xlu0.b32.cont [13/16] 0.0, 128
        %735 = vxpose.xlu0.b32.cont [14/16] 0.0, 128
        %736 = vxpose.xlu0.b32.cont [15/16] 0.0, 128
        %737 = vxpose.xlu0.b32.end [16/16] 0.0, 128
        %v738 = vpop.trf.xlu0
        %v739 = vpop.trf.xlu0
        %v740 = vpop.trf.xlu0
        %v741 = vpop.trf.xlu0
        %v742 = vpop.trf.xlu0
        %v743 = vpop.trf.xlu0
        %v744 = vpop.trf.xlu0
        %v745 = vpop.trf.xlu0
        %v746 = vpop.trf.xlu0
        %v747 = vpop.trf.xlu0
        %v748 = vpop.trf.xlu0
        %v749 = vpop.trf.xlu0
        %v750 = vpop.trf.xlu0
        %v751 = vpop.trf.xlu0
        %v752 = vpop.trf.xlu0
        %v753 = vpop.trf.xlu0
        %754 = vset.pattern.permute.xlu0 32
        %755 = vperm.xlu0 %754, %v716
        %v756 = vpop.permute.xlu0 %755
        %v758 = vperm.slane %v738, 0
        %v759 = vadd.f32 %v756, %v758
        %760 = vset.pattern.permute.xlu0 33
        %761 = vperm.xlu0 %760, %v716
        %v762 = vpop.permute.xlu0 %761
        %v764 = vperm.slane %v738, 1
        %v765 = vadd.f32 %v762, %v764
        %vm766 = vcmp.gt.f32.partialorder %v759, 0.0
        %vm767 = vcmp.gt.f32.partialorder %v765, 0.0
        %v768 = vmul.f32 %v759, 0.2
        %v769 = vmul.f32 %v765, 0.2
        %v770 = vsel %vm766, %v759, %v768
        %v771 = vsel %vm767, %v765, %v769
        %v772 = vadd.f32 %v770, %v525
        %v773 = vadd.f32 %v771, %v526
        %v774 = vsel %vm611, %v772, -inf
        %775 = vmax.xlane.f32.xlu0 %v774
        %v776 = vpop.xlane.xlu0 %775
        %v777 = vsel %vm611, %v773, -inf
        %778 = vmax.xlane.f32.xlu0 %v777
        %v779 = vpop.xlane.xlu0 %778
        %v780 = vsub.f32 %v772, %v776
        %v781 = vsub.f32 %v773, %v779
        %v782 = vmul.f32 %v780, 1.442695
        %v783 = vpow.pop %v782
        %v784 = vmul.f32 %v781, 1.442695
        %v785 = vpow.pop %v784
        %v786 = vsel %vm611, %v783, 0.0
        %787 = vadd.xlane.f32.xlu0 %v786
        %v788 = vpop.xlane.xlu0 %787
        %v789 = vsel %vm611, %v785, 0.0
        %790 = vadd.xlane.f32.xlu0 %v789
        %v791 = vpop.xlane.xlu0 %790
        %v792 = vmax.f32 %v788, 1e-16
        %v793 = vmax.f32 %v791, 1e-16
        %v794 = vrcp.pop %v792
        %v795 = vrcp.pop %v793
        %v796 = vmul.f32 %v783, %v794
        %v797 = vmul.f32 %v785, %v795
        %v798 = vmul.f32 %v716, %v518
        %v799 = vmul.f32 %v716, %v523
        %v801 = vsel %vm611, %v797, 0
        %803 = vmatpush.msra.mxu0 0.0
        %804 = vmatpush.msra.mxu0 0.0
        %805 = vmatpush.msra.mxu0 0.0
        %806 = vmatpush.msra.mxu0 0.0
        %807 = vmatpush.msra.mxu0 0.0
        %808 = vmatpush.msra.mxu0 0.0
        %809 = vmatpush.msra.mxu0 0.0
        %810 = vmatpush.msra.mxu0 0.0
        %811 = vmatpush.msra.mxu0 0.0
        %812 = vmatpush.msra.mxu0 0.0
        %813 = vmatpush.msra.mxu0 0.0
        %814 = vmatpush.msra.mxu0 0.0
        %815 = vmatpush.msra.mxu0 0.0
        %816 = vmatpush.msra.mxu0 0.0
        %817 = vmatpush.msra.mxu0 0.0
        %818 = vmatpush.msra.mxu0 %v799
        %819 = vmatmul.f32.gmra.mxu0 %v801
        %v820 = vpop.f32.mrf.mxu0
        %v821 = vadd.f32 0.0, %v820
        %822 = vdwg.mxu0
        %v824 = vsel %vm611, %v796, 0
        %826 = vmatpush.msra.mxu0 0.0
        %827 = vmatpush.msra.mxu0 0.0
        %828 = vmatpush.msra.mxu0 0.0
        %829 = vmatpush.msra.mxu0 0.0
        %830 = vmatpush.msra.mxu0 0.0
        %831 = vmatpush.msra.mxu0 0.0
        %832 = vmatpush.msra.mxu0 0.0
        %833 = vmatpush.msra.mxu0 0.0
        %834 = vmatpush.msra.mxu0 0.0
        %835 = vmatpush.msra.mxu0 0.0
        %836 = vmatpush.msra.mxu0 0.0
        %837 = vmatpush.msra.mxu0 0.0
        %838 = vmatpush.msra.mxu0 0.0
        %839 = vmatpush.msra.mxu0 0.0
        %840 = vmatpush.msra.mxu0 0.0
        %841 = vmatpush.msra.mxu0 %v798
        %842 = vmatmul.f32.gmra.mxu0 %v824
        %v843 = vpop.f32.mrf.mxu0
        %v844 = vadd.f32 %v821, %v843
        %845 = vdwg.mxu0
        %s846 = scalar_lea.vmem %s8, 1
        %v847 = vld [vmem:[%s846] sm:$0x1]
        %v849 = vperm.slane %v847, 0
        %v851 = vadd.f32 %v844, %v849
        %v852 = vld [vmem:[%s498] sm:$0xff]
        %v853 = vld [vmem:[%s498 + $0x8] sm:$0xff]
        %v854 = vld [vmem:[%s498 + $0x10] sm:$0xff]
        %v855 = vld [vmem:[%s498 + $0x18] sm:$0xff]
        %v857 = vsel %vm611, %v852, 0
        %v860 = vsel %vm611, %v853, 0
        %v863 = vsel %vm611, %v854, 0
        %v866 = vsel %vm611, %v855, 0
        %868 = vmatpush.msra.mxu0 0.0
        %869 = vmatpush.msra.mxu0 0.0
        %870 = vmatpush.msra.mxu0 0.0
        %871 = vmatpush.msra.mxu0 0.0
        %872 = vmatpush.msra.mxu0 0.0
        %873 = vmatpush.msra.mxu0 0.0
        %874 = vmatpush.msra.mxu0 0.0
        %875 = vmatpush.msra.mxu0 0.0
        %876 = vmatpush.msra.mxu0 0.0
        %877 = vmatpush.msra.mxu0 0.0
        %878 = vmatpush.msra.mxu0 0.0
        %879 = vmatpush.msra.mxu0 0.0
        %880 = vmatpush.msra.mxu0 0.0
        %881 = vmatpush.msra.mxu0 0.0
        %882 = vmatpush.msra.mxu0 0.0
        %883 = vmatpush.msra.mxu0 %v851
        %884 = vmatmul.f32.gmra.mxu0 %v857
        %v885 = vpop.f32.mrf.mxu0
        %v886 = vadd.f32 0.0, %v885
        %887 = vmatmul.f32.gmra.mxu0 %v860
        %v888 = vpop.f32.mrf.mxu0
        %v889 = vadd.f32 0.0, %v888
        %890 = vmatmul.f32.gmra.mxu0 %v863
        %v891 = vpop.f32.mrf.mxu0
        %v892 = vadd.f32 0.0, %v891
        %893 = vmatmul.f32.gmra.mxu0 %v866
        %v894 = vpop.f32.mrf.mxu0
        %v895 = vadd.f32 0.0, %v894
        %896 = vdwg.mxu0
        %v897 = vld [vmem:[%s493] sm:$0xff]
        %v898 = vld [vmem:[%s493 + $0x8] sm:$0xff]
        %v899 = vld [vmem:[%s493 + $0x10] sm:$0xff]
        %v900 = vld [vmem:[%s493 + $0x18] sm:$0xff]
        %s901 = scalar_lea.vmem %s7, 64
        %v902 = vld [vmem:[%s901] sm:$0xff]
        %v903 = vld [vmem:[%s901 + $0x8] sm:$0xff]
        %v904 = vld [vmem:[%s901 + $0x10] sm:$0xff]
        %v905 = vld [vmem:[%s901 + $0x18] sm:$0xff]
        %v907 = vsel %vm531, %v886, 0
        %v910 = vsel %vm531, %v889, 0
        %912 = vmatpush.msra.mxu0 0.0
        %913 = vmatpush.msra.mxu0 0.0
        %914 = vmatpush.msra.mxu0 0.0
        %915 = vmatpush.msra.mxu0 0.0
        %916 = vmatpush.msra.mxu0 0.0
        %917 = vmatpush.msra.mxu0 0.0
        %918 = vmatpush.msra.mxu0 0.0
        %919 = vmatpush.msra.mxu0 0.0
        %920 = vmatpush.msra.mxu0 0.0
        %921 = vmatpush.msra.mxu0 0.0
        %922 = vmatpush.msra.mxu0 0.0
        %923 = vmatpush.msra.mxu0 0.0
        %924 = vmatpush.msra.mxu0 %v905
        %925 = vmatpush.msra.mxu0 %v904
        %926 = vmatpush.msra.mxu0 %v903
        %927 = vmatpush.msra.mxu0 %v902
        %928 = vmatmul.f32.gmra.mxu0 %v907
        %v929 = vpop.f32.mrf.mxu0
        %v930 = vadd.f32 0.0, %v929
        %931 = vmatmul.f32.gmra.mxu0 %v910
        %v932 = vpop.f32.mrf.mxu0
        %v933 = vadd.f32 0.0, %v932
        %934 = vdwg.mxu0
        %937 = vrot.lane.b32.xlu0 %v930, 94
        %v938 = vpop.permute.xlu0 %937
        %939 = vrot.lane.b32.xlu0 %v933, 94
        %v940 = vpop.permute.xlu0 %939
        %943 = vxpose.xlu0.b32.start [1/16] %v938, 128
        %944 = vxpose.xlu0.b32.cont [2/16] %v940, 128
        %945 = vxpose.xlu0.b32.cont [3/16] 0.0, 128
        %946 = vxpose.xlu0.b32.cont [4/16] 0.0, 128
        %947 = vxpose.xlu0.b32.cont [5/16] 0.0, 128
        %948 = vxpose.xlu0.b32.cont [6/16] 0.0, 128
        %949 = vxpose.xlu0.b32.cont [7/16] 0.0, 128
        %950 = vxpose.xlu0.b32.cont [8/16] 0.0, 128
        %951 = vxpose.xlu0.b32.cont [9/16] 0.0, 128
        %952 = vxpose.xlu0.b32.cont [10/16] 0.0, 128
        %953 = vxpose.xlu0.b32.cont [11/16] 0.0, 128
        %954 = vxpose.xlu0.b32.cont [12/16] 0.0, 128
        %955 = vxpose.xlu0.b32.cont [13/16] 0.0, 128
        %956 = vxpose.xlu0.b32.cont [14/16] 0.0, 128
        %957 = vxpose.xlu0.b32.cont [15/16] 0.0, 128
        %958 = vxpose.xlu0.b32.end [16/16] 0.0, 128
        %v959 = vpop.trf.xlu0
        %v960 = vpop.trf.xlu0
        %v961 = vpop.trf.xlu0
        %v962 = vpop.trf.xlu0
        %v963 = vpop.trf.xlu0
        %v964 = vpop.trf.xlu0
        %v965 = vpop.trf.xlu0
        %v966 = vpop.trf.xlu0
        %v967 = vpop.trf.xlu0
        %v968 = vpop.trf.xlu0
        %v969 = vpop.trf.xlu0
        %v970 = vpop.trf.xlu0
        %v971 = vpop.trf.xlu0
        %v972 = vpop.trf.xlu0
        %v973 = vpop.trf.xlu0
        %v974 = vpop.trf.xlu0
        %975 = vset.pattern.permute.xlu0 32
        %976 = vperm.xlu0 %975, %v930
        %v977 = vpop.permute.xlu0 %976
        %979 = vset.pattern.permute.xlu0 32
        %980 = vperm.xlu0 %979, %v933
        %v981 = vpop.permute.xlu0 %980
        %v983 = vperm.slane %v959, 0
        %v984 = vadd.f32 %v977, %v983
        %v985 = vadd.f32 %v981, %v983
        %986 = vset.pattern.permute.xlu0 33
        %987 = vperm.xlu0 %986, %v930
        %v988 = vpop.permute.xlu0 %987
        %990 = vset.pattern.permute.xlu0 33
        %991 = vperm.xlu0 %990, %v933
        %v992 = vpop.permute.xlu0 %991
        %v994 = vperm.slane %v959, 1
        %v995 = vadd.f32 %v988, %v994
        %v996 = vadd.f32 %v992, %v994
        %vm997 = vcmp.gt.f32.partialorder %v984, 0.0
        %vm998 = vcmp.gt.f32.partialorder %v985, 0.0
        %vm999 = vcmp.gt.f32.partialorder %v995, 0.0
        %vm1000 = vcmp.gt.f32.partialorder %v996, 0.0
        %v1001 = vmul.f32 %v984, 0.2
        %v1002 = vmul.f32 %v985, 0.2
        %v1003 = vmul.f32 %v995, 0.2
        %v1004 = vmul.f32 %v996, 0.2
        %v1005 = vsel %vm997, %v984, %v1001
        %v1006 = vsel %vm998, %v985, %v1002
        %v1007 = vsel %vm999, %v995, %v1003
        %v1008 = vsel %vm1000, %v996, %v1004
        %v1009 = vadd.f32 %v1005, %v897
        %v1010 = vadd.f32 %v1006, %v898
        %v1011 = vadd.f32 %v1007, %v899
        %v1012 = vadd.f32 %v1008, %v900
        %vm1013 = vcmask 130048
        %v1014 = vsel %vm1013, %v1009, -inf
        %1015 = vmax.xlane.f32.xlu0 %v1014
        %v1016 = vpop.xlane.xlu0 %1015
        %v1017 = vsel %vm1013, %v1010, -inf
        %1018 = vmax.xlane.f32.xlu0 %v1017
        %v1019 = vpop.xlane.xlu0 %1018
        %v1020 = vsel %vm1013, %v1011, -inf
        %1021 = vmax.xlane.f32.xlu0 %v1020
        %v1022 = vpop.xlane.xlu0 %1021
        %v1023 = vsel %vm1013, %v1012, -inf
        %1024 = vmax.xlane.f32.xlu0 %v1023
        %v1025 = vpop.xlane.xlu0 %1024
        %v1026 = vsub.f32 %v1009, %v1016
        %v1027 = vsub.f32 %v1010, %v1019
        %v1028 = vsub.f32 %v1011, %v1022
        %v1029 = vsub.f32 %v1012, %v1025
        %v1030 = vmul.f32 %v1026, 1.442695
        %v1031 = vpow.pop %v1030
        %v1032 = vmul.f32 %v1027, 1.442695
        %v1033 = vpow.pop %v1032
        %v1034 = vmul.f32 %v1028, 1.442695
        %v1035 = vpow.pop %v1034
        %v1036 = vmul.f32 %v1029, 1.442695
        %v1037 = vpow.pop %v1036
        %v1038 = vsel %vm1013, %v1031, 0.0
        %1039 = vadd.xlane.f32.xlu0 %v1038
        %v1040 = vpop.xlane.xlu0 %1039
        %v1041 = vsel %vm1013, %v1033, 0.0
        %1042 = vadd.xlane.f32.xlu0 %v1041
        %v1043 = vpop.xlane.xlu0 %1042
        %v1044 = vsel %vm1013, %v1035, 0.0
        %1045 = vadd.xlane.f32.xlu0 %v1044
        %v1046 = vpop.xlane.xlu0 %1045
        %v1047 = vsel %vm1013, %v1037, 0.0
        %1048 = vadd.xlane.f32.xlu0 %v1047
        %v1049 = vpop.xlane.xlu0 %1048
        %v1050 = vmax.f32 %v1040, 1e-16
        %v1051 = vmax.f32 %v1043, 1e-16
        %v1052 = vmax.f32 %v1046, 1e-16
        %v1053 = vmax.f32 %v1049, 1e-16
        %v1054 = vrcp.pop %v1050
        %v1055 = vrcp.pop %v1051
        %v1056 = vrcp.pop %v1052
        %v1057 = vrcp.pop %v1053
        %v1058 = vmul.f32 %v1031, %v1054
        %v1059 = vmul.f32 %v1033, %v1055
        %v1060 = vmul.f32 %v1035, %v1056
        %v1061 = vmul.f32 %v1037, %v1057
        %v1062 = vmul.f32 %v930, %v518
        %v1063 = vmul.f32 %v933, %v518
        %v1064 = vmul.f32 %v930, %v523
        %v1065 = vmul.f32 %v933, %v523
        %v1067 = vsel %vm1013, %v1060, 0
        %v1070 = vsel %vm1013, %v1061, 0
        %1072 = vmatpush.msra.mxu0 0.0
        %1073 = vmatpush.msra.mxu0 0.0
        %1074 = vmatpush.msra.mxu0 0.0
        %1075 = vmatpush.msra.mxu0 0.0
        %1076 = vmatpush.msra.mxu0 0.0
        %1077 = vmatpush.msra.mxu0 0.0
        %1078 = vmatpush.msra.mxu0 0.0
        %1079 = vmatpush.msra.mxu0 0.0
        %1080 = vmatpush.msra.mxu0 0.0
        %1081 = vmatpush.msra.mxu0 0.0
        %1082 = vmatpush.msra.mxu0 0.0
        %1083 = vmatpush.msra.mxu0 0.0
        %1084 = vmatpush.msra.mxu0 0.0
        %1085 = vmatpush.msra.mxu0 0.0
        %1086 = vmatpush.msra.mxu0 %v1065
        %1087 = vmatpush.msra.mxu0 %v1064
        %1088 = vmatmul.f32.gmra.mxu0 %v1067
        %v1089 = vpop.f32.mrf.mxu0
        %v1090 = vadd.f32 0.0, %v1089
        %1091 = vmatmul.f32.gmra.mxu0 %v1070
        %v1092 = vpop.f32.mrf.mxu0
        %v1093 = vadd.f32 0.0, %v1092
        %1094 = vdwg.mxu0
        %v1096 = vsel %vm1013, %v1058, 0
        %v1099 = vsel %vm1013, %v1059, 0
        %1101 = vmatpush.msra.mxu0 0.0
        %1102 = vmatpush.msra.mxu0 0.0
        %1103 = vmatpush.msra.mxu0 0.0
        %1104 = vmatpush.msra.mxu0 0.0
        %1105 = vmatpush.msra.mxu0 0.0
        %1106 = vmatpush.msra.mxu0 0.0
        %1107 = vmatpush.msra.mxu0 0.0
        %1108 = vmatpush.msra.mxu0 0.0
        %1109 = vmatpush.msra.mxu0 0.0
        %1110 = vmatpush.msra.mxu0 0.0
        %1111 = vmatpush.msra.mxu0 0.0
        %1112 = vmatpush.msra.mxu0 0.0
        %1113 = vmatpush.msra.mxu0 0.0
        %1114 = vmatpush.msra.mxu0 0.0
        %1115 = vmatpush.msra.mxu0 %v1063
        %1116 = vmatpush.msra.mxu0 %v1062
        %1117 = vmatmul.f32.gmra.mxu0 %v1096
        %v1118 = vpop.f32.mrf.mxu0
        %v1119 = vadd.f32 %v1090, %v1118
        %1120 = vmatmul.f32.gmra.mxu0 %v1099
        %v1121 = vpop.f32.mrf.mxu0
        %v1122 = vadd.f32 %v1093, %v1121
        %1123 = vdwg.mxu0
        %s1124 = scalar_lea.vmem %s8, 2
        %v1125 = vld [vmem:[%s1124] sm:$0x1]
        %v1127 = vperm.slane %v1125, 0
        %v1129 = vadd.f32 %v1119, %v1127
        %v1130 = vadd.f32 %v1122, %v1127
        %v1131 = vmax.f32 %v1129, 0.0
        %v1132 = vmax.f32 %v1130, 0.0
        %s1133 = scalar_lea.vmem %s7, 96
        %v1134 = vld [vmem:[%s1133] sm:$0xff]
        %v1135 = vld [vmem:[%s1133 + $0x8] sm:$0xff]
        %v1136 = vld [vmem:[%s1133 + $0x10] sm:$0xff]
        %v1137 = vld [vmem:[%s1133 + $0x18] sm:$0xff]
        %v1139 = vsel %vm531, %v1131, 0
        %v1142 = vsel %vm531, %v1132, 0
        %1144 = vmatpush.msra.mxu0 0.0
        %1145 = vmatpush.msra.mxu0 0.0
        %1146 = vmatpush.msra.mxu0 0.0
        %1147 = vmatpush.msra.mxu0 0.0
        %1148 = vmatpush.msra.mxu0 0.0
        %1149 = vmatpush.msra.mxu0 0.0
        %1150 = vmatpush.msra.mxu0 0.0
        %1151 = vmatpush.msra.mxu0 0.0
        %1152 = vmatpush.msra.mxu0 0.0
        %1153 = vmatpush.msra.mxu0 0.0
        %1154 = vmatpush.msra.mxu0 0.0
        %1155 = vmatpush.msra.mxu0 0.0
        %1156 = vmatpush.msra.mxu0 %v1137
        %1157 = vmatpush.msra.mxu0 %v1136
        %1158 = vmatpush.msra.mxu0 %v1135
        %1159 = vmatpush.msra.mxu0 %v1134
        %1160 = vmatmul.f32.gmra.mxu0 %v1139
        %v1161 = vpop.f32.mrf.mxu0
        %v1162 = vadd.f32 0.0, %v1161
        %1163 = vmatmul.f32.gmra.mxu0 %v1142
        %v1164 = vpop.f32.mrf.mxu0
        %v1165 = vadd.f32 0.0, %v1164
        %1166 = vdwg.mxu0
        %1169 = vrot.lane.b32.xlu0 %v1162, 94
        %v1170 = vpop.permute.xlu0 %1169
        %1171 = vrot.lane.b32.xlu0 %v1165, 94
        %v1172 = vpop.permute.xlu0 %1171
        %1175 = vxpose.xlu0.b32.start [1/16] %v1170, 128
        %1176 = vxpose.xlu0.b32.cont [2/16] %v1172, 128
        %1177 = vxpose.xlu0.b32.cont [3/16] 0.0, 128
        %1178 = vxpose.xlu0.b32.cont [4/16] 0.0, 128
        %1179 = vxpose.xlu0.b32.cont [5/16] 0.0, 128
        %1180 = vxpose.xlu0.b32.cont [6/16] 0.0, 128
        %1181 = vxpose.xlu0.b32.cont [7/16] 0.0, 128
        %1182 = vxpose.xlu0.b32.cont [8/16] 0.0, 128
        %1183 = vxpose.xlu0.b32.cont [9/16] 0.0, 128
        %1184 = vxpose.xlu0.b32.cont [10/16] 0.0, 128
        %1185 = vxpose.xlu0.b32.cont [11/16] 0.0, 128
        %1186 = vxpose.xlu0.b32.cont [12/16] 0.0, 128
        %1187 = vxpose.xlu0.b32.cont [13/16] 0.0, 128
        %1188 = vxpose.xlu0.b32.cont [14/16] 0.0, 128
        %1189 = vxpose.xlu0.b32.cont [15/16] 0.0, 128
        %1190 = vxpose.xlu0.b32.end [16/16] 0.0, 128
        %v1191 = vpop.trf.xlu0
        %v1192 = vpop.trf.xlu0
        %v1193 = vpop.trf.xlu0
        %v1194 = vpop.trf.xlu0
        %v1195 = vpop.trf.xlu0
        %v1196 = vpop.trf.xlu0
        %v1197 = vpop.trf.xlu0
        %v1198 = vpop.trf.xlu0
        %v1199 = vpop.trf.xlu0
        %v1200 = vpop.trf.xlu0
        %v1201 = vpop.trf.xlu0
        %v1202 = vpop.trf.xlu0
        %v1203 = vpop.trf.xlu0
        %v1204 = vpop.trf.xlu0
        %v1205 = vpop.trf.xlu0
        %v1206 = vpop.trf.xlu0
        %1207 = vset.pattern.permute.xlu0 32
        %1208 = vperm.xlu0 %1207, %v1162
        %v1209 = vpop.permute.xlu0 %1208
        %1211 = vset.pattern.permute.xlu0 32
        %1212 = vperm.xlu0 %1211, %v1165
        %v1213 = vpop.permute.xlu0 %1212
        %v1215 = vperm.slane %v1191, 0
        %v1216 = vadd.f32 %v1209, %v1215
        %v1217 = vadd.f32 %v1213, %v1215
        %1218 = vset.pattern.permute.xlu0 33
        %1219 = vperm.xlu0 %1218, %v1162
        %v1220 = vpop.permute.xlu0 %1219
        %1222 = vset.pattern.permute.xlu0 33
        %1223 = vperm.xlu0 %1222, %v1165
        %v1224 = vpop.permute.xlu0 %1223
        %v1226 = vperm.slane %v1191, 1
        %v1227 = vadd.f32 %v1220, %v1226
        %v1228 = vadd.f32 %v1224, %v1226
        %vm1229 = vcmp.gt.f32.partialorder %v1216, 0.0
        %vm1230 = vcmp.gt.f32.partialorder %v1217, 0.0
        %vm1231 = vcmp.gt.f32.partialorder %v1227, 0.0
        %vm1232 = vcmp.gt.f32.partialorder %v1228, 0.0
        %v1233 = vmul.f32 %v1216, 0.2
        %v1234 = vmul.f32 %v1217, 0.2
        %v1235 = vmul.f32 %v1227, 0.2
        %v1236 = vmul.f32 %v1228, 0.2
        %v1237 = vsel %vm1229, %v1216, %v1233
        %v1238 = vsel %vm1230, %v1217, %v1234
        %v1239 = vsel %vm1231, %v1227, %v1235
        %v1240 = vsel %vm1232, %v1228, %v1236
        %v1241 = vadd.f32 %v1237, %v897
        %v1242 = vadd.f32 %v1238, %v898
        %v1243 = vadd.f32 %v1239, %v899
        %v1244 = vadd.f32 %v1240, %v900
        %v1245 = vsel %vm1013, %v1241, -inf
        %1246 = vmax.xlane.f32.xlu0 %v1245
        %v1247 = vpop.xlane.xlu0 %1246
        %v1248 = vsel %vm1013, %v1242, -inf
        %1249 = vmax.xlane.f32.xlu0 %v1248
        %v1250 = vpop.xlane.xlu0 %1249
        %v1251 = vsel %vm1013, %v1243, -inf
        %1252 = vmax.xlane.f32.xlu0 %v1251
        %v1253 = vpop.xlane.xlu0 %1252
        %v1254 = vsel %vm1013, %v1244, -inf
        %1255 = vmax.xlane.f32.xlu0 %v1254
        %v1256 = vpop.xlane.xlu0 %1255
        %v1257 = vsub.f32 %v1241, %v1247
        %v1258 = vsub.f32 %v1242, %v1250
        %v1259 = vsub.f32 %v1243, %v1253
        %v1260 = vsub.f32 %v1244, %v1256
        %v1261 = vmul.f32 %v1257, 1.442695
        %v1262 = vpow.pop %v1261
        %v1263 = vmul.f32 %v1258, 1.442695
        %v1264 = vpow.pop %v1263
        %v1265 = vmul.f32 %v1259, 1.442695
        %v1266 = vpow.pop %v1265
        %v1267 = vmul.f32 %v1260, 1.442695
        %v1268 = vpow.pop %v1267
        %v1269 = vsel %vm1013, %v1262, 0.0
        %1270 = vadd.xlane.f32.xlu0 %v1269
        %v1271 = vpop.xlane.xlu0 %1270
        %v1272 = vsel %vm1013, %v1264, 0.0
        %1273 = vadd.xlane.f32.xlu0 %v1272
        %v1274 = vpop.xlane.xlu0 %1273
        %v1275 = vsel %vm1013, %v1266, 0.0
        %1276 = vadd.xlane.f32.xlu0 %v1275
        %v1277 = vpop.xlane.xlu0 %1276
        %v1278 = vsel %vm1013, %v1268, 0.0
        %1279 = vadd.xlane.f32.xlu0 %v1278
        %v1280 = vpop.xlane.xlu0 %1279
        %v1281 = vmax.f32 %v1271, 1e-16
        %v1282 = vmax.f32 %v1274, 1e-16
        %v1283 = vmax.f32 %v1277, 1e-16
        %v1284 = vmax.f32 %v1280, 1e-16
        %v1285 = vrcp.pop %v1281
        %v1286 = vrcp.pop %v1282
        %v1287 = vrcp.pop %v1283
        %v1288 = vrcp.pop %v1284
        %v1289 = vmul.f32 %v1262, %v1285
        %v1290 = vmul.f32 %v1264, %v1286
        %v1291 = vmul.f32 %v1266, %v1287
        %v1292 = vmul.f32 %v1268, %v1288
        %v1293 = vmul.f32 %v1162, %v518
        %v1294 = vmul.f32 %v1165, %v518
        %v1295 = vmul.f32 %v1162, %v523
        %v1296 = vmul.f32 %v1165, %v523
        %v1298 = vsel %vm1013, %v1291, 0
        %v1301 = vsel %vm1013, %v1292, 0
        %1303 = vmatpush.msra.mxu0 0.0
        %1304 = vmatpush.msra.mxu0 0.0
        %1305 = vmatpush.msra.mxu0 0.0
        %1306 = vmatpush.msra.mxu0 0.0
        %1307 = vmatpush.msra.mxu0 0.0
        %1308 = vmatpush.msra.mxu0 0.0
        %1309 = vmatpush.msra.mxu0 0.0
        %1310 = vmatpush.msra.mxu0 0.0
        %1311 = vmatpush.msra.mxu0 0.0
        %1312 = vmatpush.msra.mxu0 0.0
        %1313 = vmatpush.msra.mxu0 0.0
        %1314 = vmatpush.msra.mxu0 0.0
        %1315 = vmatpush.msra.mxu0 0.0
        %1316 = vmatpush.msra.mxu0 0.0
        %1317 = vmatpush.msra.mxu0 %v1296
        %1318 = vmatpush.msra.mxu0 %v1295
        %1319 = vmatmul.f32.gmra.mxu0 %v1298
        %v1320 = vpop.f32.mrf.mxu0
        %v1321 = vadd.f32 0.0, %v1320
        %1322 = vmatmul.f32.gmra.mxu0 %v1301
        %v1323 = vpop.f32.mrf.mxu0
        %v1324 = vadd.f32 0.0, %v1323
        %1325 = vdwg.mxu0
        %v1327 = vsel %vm1013, %v1289, 0
        %v1330 = vsel %vm1013, %v1290, 0
        %1332 = vmatpush.msra.mxu0 0.0
        %1333 = vmatpush.msra.mxu0 0.0
        %1334 = vmatpush.msra.mxu0 0.0
        %1335 = vmatpush.msra.mxu0 0.0
        %1336 = vmatpush.msra.mxu0 0.0
        %1337 = vmatpush.msra.mxu0 0.0
        %1338 = vmatpush.msra.mxu0 0.0
        %1339 = vmatpush.msra.mxu0 0.0
        %1340 = vmatpush.msra.mxu0 0.0
        %1341 = vmatpush.msra.mxu0 0.0
        %1342 = vmatpush.msra.mxu0 0.0
        %1343 = vmatpush.msra.mxu0 0.0
        %1344 = vmatpush.msra.mxu0 0.0
        %1345 = vmatpush.msra.mxu0 0.0
        %1346 = vmatpush.msra.mxu0 %v1294
        %1347 = vmatpush.msra.mxu0 %v1293
        %1348 = vmatmul.f32.gmra.mxu0 %v1327
        %v1349 = vpop.f32.mrf.mxu0
        %v1350 = vadd.f32 %v1321, %v1349
        %1351 = vmatmul.f32.gmra.mxu0 %v1330
        %v1352 = vpop.f32.mrf.mxu0
        %v1353 = vadd.f32 %v1324, %v1352
        %1354 = vdwg.mxu0
        %s1355 = scalar_lea.vmem %s8, 3
        %v1356 = vld [vmem:[%s1355] sm:$0x1]
        %v1358 = vperm.slane %v1356, 0
        %v1360 = vadd.f32 %v1350, %v1358
        %v1361 = vadd.f32 %v1353, %v1358
        %v1362 = vsub.f32 %v892, %v1360
        %v1363 = vsub.f32 %v895, %v1361
        %v1364 = vld [vmem:[#allocation2] sm:$0xff]
        %v1365 = vld [vmem:[#allocation2 + $0x8] sm:$0xff]
        %v1366 = vld [vmem:[#allocation2 + $0x10] sm:$0xff]
        %v1367 = vld [vmem:[#allocation2 + $0x18] sm:$0xff]
        %v1368 = vld [vmem:[%s10] sm:$0x1]
        %v1370 = vperm.slane %v1368, 0
        %v1373 = vsel %vm531, %v1362, 0
        %v1376 = vsel %vm531, %v1363, 0
        %1378 = vmatpush.msra.mxu0 0.0
        %1379 = vmatpush.msra.mxu0 0.0
        %1380 = vmatpush.msra.mxu0 0.0
        %1381 = vmatpush.msra.mxu0 0.0
        %1382 = vmatpush.msra.mxu0 0.0
        %1383 = vmatpush.msra.mxu0 0.0
        %1384 = vmatpush.msra.mxu0 0.0
        %1385 = vmatpush.msra.mxu0 0.0
        %1386 = vmatpush.msra.mxu0 0.0
        %1387 = vmatpush.msra.mxu0 0.0
        %1388 = vmatpush.msra.mxu0 0.0
        %1389 = vmatpush.msra.mxu0 0.0
        %1390 = vmatpush.msra.mxu0 %v1367
        %1391 = vmatpush.msra.mxu0 %v1366
        %1392 = vmatpush.msra.mxu0 %v1365
        %1393 = vmatpush.msra.mxu0 %v1364
        %1394 = vmatmul.f32.gmra.mxu0 %v1373
        %v1395 = vpop.f32.mrf.mxu0
        %v1396 = vadd.f32 %v1370, %v1395
        %1397 = vmatmul.f32.gmra.mxu0 %v1376
        %v1398 = vpop.f32.mrf.mxu0
        %v1399 = vadd.f32 %v1370, %v1398
        %1400 = vdwg.mxu0
        %v1401 = vmax.f32 %v1396, 0.0
        %v1402 = vmax.f32 %v1399, 0.0
        %s1403 = scalar_lea.vmem [#allocation2], 96
        %v1404 = vld [vmem:[%s1403] sm:$0xff]
        %v1405 = vld [vmem:[%s1403 + $0x8] sm:$0xff]
        %v1406 = vld [vmem:[%s1403 + $0x10] sm:$0xff]
        %v1407 = vld [vmem:[%s1403 + $0x18] sm:$0xff]
        %v1408 = vld [vmem:[%s1403 + $0x20] sm:$0xff]
        %v1409 = vld [vmem:[%s1403 + $0x28] sm:$0xff]
        %v1410 = vld [vmem:[%s1403 + $0x30] sm:$0xff]
        %v1411 = vld [vmem:[%s1403 + $0x38] sm:$0xff]
        %v1412 = vld [vmem:[%s1403 + $0x40] sm:$0xff]
        %v1413 = vld [vmem:[%s1403 + $0x48] sm:$0xff]
        %v1414 = vld [vmem:[%s1403 + $0x50] sm:$0xff]
        %v1415 = vld [vmem:[%s1403 + $0x58] sm:$0xff]
        %s1416 = scalar_lea.vmem %s10, 1
        %v1417 = vld [vmem:[%s1416] sm:$0x1]
        %v1419 = vperm.slane %v1417, 0
        %vm1421 = vcmask 785408
        %v1423 = vsel %vm1421, %v1401, 0
        %v1426 = vsel %vm1421, %v1402, 0
        %1428 = vmatpush.msra.mxu0 0.0
        %1429 = vmatpush.msra.mxu0 0.0
        %1430 = vmatpush.msra.mxu0 0.0
        %1431 = vmatpush.msra.mxu0 0.0
        %1432 = vmatpush.msra.mxu0 %v1415
        %1433 = vmatpush.msra.mxu0 %v1414
        %1434 = vmatpush.msra.mxu0 %v1413
        %1435 = vmatpush.msra.mxu0 %v1412
        %1436 = vmatpush.msra.mxu0 %v1411
        %1437 = vmatpush.msra.mxu0 %v1410
        %1438 = vmatpush.msra.mxu0 %v1409
        %1439 = vmatpush.msra.mxu0 %v1408
        %1440 = vmatpush.msra.mxu0 %v1407
        %1441 = vmatpush.msra.mxu0 %v1406
        %1442 = vmatpush.msra.mxu0 %v1405
        %1443 = vmatpush.msra.mxu0 %v1404
        %1444 = vmatmul.f32.gmra.mxu0 %v1423
        %v1445 = vpop.f32.mrf.mxu0
        %v1446 = vadd.f32 %v1419, %v1445
        %1447 = vmatmul.f32.gmra.mxu0 %v1426
        %v1448 = vpop.f32.mrf.mxu0
        %v1449 = vadd.f32 %v1419, %v1448
        %1450 = vdwg.mxu0
        %v1451 = vmax.f32 %v1446, 0.0
        %v1452 = vmax.f32 %v1449, 0.0
        %s1453 = scalar_lea.vmem [#allocation2], 192
        %v1454 = vld [vmem:[%s1453] sm:$0xff]
        %v1455 = vld [vmem:[%s1453 + $0x8] sm:$0xff]
        %v1456 = vld [vmem:[%s1453 + $0x10] sm:$0xff]
        %v1457 = vld [vmem:[%s1453 + $0x18] sm:$0xff]
        %v1458 = vld [vmem:[%s1453 + $0x20] sm:$0xff]
        %v1459 = vld [vmem:[%s1453 + $0x28] sm:$0xff]
        %v1460 = vld [vmem:[%s1453 + $0x30] sm:$0xff]
        %v1461 = vld [vmem:[%s1453 + $0x38] sm:$0xff]
        %v1462 = vld [vmem:[%s1453 + $0x40] sm:$0xff]
        %v1463 = vld [vmem:[%s1453 + $0x48] sm:$0xff]
        %v1464 = vld [vmem:[%s1453 + $0x50] sm:$0xff]
        %v1465 = vld [vmem:[%s1453 + $0x58] sm:$0xff]
        %s1466 = scalar_lea.vmem %s10, 2
        %v1467 = vld [vmem:[%s1466] sm:$0x1]
        %v1469 = vperm.slane %v1467, 0
        %v1472 = vsel %vm1421, %v1451, 0
        %v1475 = vsel %vm1421, %v1452, 0
        %1477 = vmatpush.msra.mxu0 0.0
        %1478 = vmatpush.msra.mxu0 0.0
        %1479 = vmatpush.msra.mxu0 0.0
        %1480 = vmatpush.msra.mxu0 0.0
        %1481 = vmatpush.msra.mxu0 %v1465
        %1482 = vmatpush.msra.mxu0 %v1464
        %1483 = vmatpush.msra.mxu0 %v1463
        %1484 = vmatpush.msra.mxu0 %v1462
        %1485 = vmatpush.msra.mxu0 %v1461
        %1486 = vmatpush.msra.mxu0 %v1460
        %1487 = vmatpush.msra.mxu0 %v1459
        %1488 = vmatpush.msra.mxu0 %v1458
        %1489 = vmatpush.msra.mxu0 %v1457
        %1490 = vmatpush.msra.mxu0 %v1456
        %1491 = vmatpush.msra.mxu0 %v1455
        %1492 = vmatpush.msra.mxu0 %v1454
        %1493 = vmatmul.f32.gmra.mxu0 %v1472
        %v1494 = vpop.f32.mrf.mxu0
        %v1495 = vadd.f32 %v1469, %v1494
        %1496 = vmatmul.f32.gmra.mxu0 %v1475
        %v1497 = vpop.f32.mrf.mxu0
        %v1498 = vadd.f32 %v1469, %v1497
        %1499 = vdwg.mxu0
        %v1500 = vld [vmem:[%s503] sm:$0xff]
        %v1501 = vld [vmem:[%s503 + $0x8] sm:$0xff]
        %1503 = vset.pattern.permute.xlu0 0
        %1504 = vperm.xlu0 %1503, %v1500
        %v1505 = vpop.permute.xlu0 %1504
        %1508 = vset.pattern.permute.xlu0 0
        %1509 = vperm.xlu0 %1508, %v1501
        %v1510 = vpop.permute.xlu0 %1509
        %v1512 = vmul.f32 %v1495, %v1505
        %v1513 = vmul.f32 %v1498, %v1510
        %v1514 = vsub.f32 1.0, %v1500
        %v1515 = vsub.f32 1.0, %v1501
        %1517 = vset.pattern.permute.xlu0 0
        %1518 = vperm.xlu0 %1517, %v1514
        %v1519 = vpop.permute.xlu0 %1518
        %1522 = vset.pattern.permute.xlu0 0
        %1523 = vperm.xlu0 %1522, %v1515
        %v1524 = vpop.permute.xlu0 %1523
        %v1526 = vmul.f32 %v1495, %v1519
        %v1527 = vmul.f32 %v1498, %v1524
        %1530 = vrot.lane.b32.xlu0 %v1526, 124
        %v1531 = vpop.permute.xlu0 %1530
        %1532 = vrot.lane.b32.xlu0 %v1527, 124
        %v1533 = vpop.permute.xlu0 %1532
        %v1536 = vadd.f32 %v1512, %v1531
        %v1537 = vadd.f32 %v1513, %v1533
        %v1538 = vmax.f32 %v1536, 0.0
        %v1539 = vmax.f32 %v1537, 0.0
        %1540 = vset.pattern.permute.xlu0 1
        %1541 = vperm.xlu0 %1540, %v1500
        %v1542 = vpop.permute.xlu0 %1541
        %1544 = vset.pattern.permute.xlu0 1
        %1545 = vperm.xlu0 %1544, %v1501
        %v1546 = vpop.permute.xlu0 %1545
        %v1548 = vmul.f32 %v1536, %v1542
        %v1549 = vmul.f32 %v1537, %v1546
        %v1550 = vsub.f32 %v1538, %v1548
        %v1551 = vsub.f32 %v1539, %v1549
        %v1552 = vand.u32 2147483647, %v1536
        %v1553 = vand.u32 2147483647, %v1537
        %v1554 = vsub.f32 0.0, %v1552
        %v1555 = vsub.f32 0.0, %v1553
        %v1556 = vmul.f32 %v1554, 1.442695
        %v1557 = vpow.pop %v1556
        %v1558 = vmul.f32 %v1555, 1.442695
        %v1559 = vpow.pop %v1558
        %v1560 = vadd.f32 %v1557, 1.0
        %v1561 = vadd.f32 %v1559, 1.0
        %v1562 = vlog2.pop %v1560
        %v1563 = vmul.f32 %v1562, 0.6931472
        %v1564 = vlog2.pop %v1561
        %v1565 = vmul.f32 %v1564, 0.6931472
        %v1566 = vadd.f32 %v1550, %v1563
        %v1567 = vadd.f32 %v1551, %v1565
        %v1568 = vld [vmem:[%s507] sm:$0xff]
        %1571 = vrot.lane.b32.xlu0 %v1566, 124
        %v1572 = vpop.permute.xlu0 %1571
        %1573 = vrot.lane.b32.xlu0 %v1567, 124
        %v1574 = vpop.permute.xlu0 %1573
        %1579 = vrot.lane.b32.xlu0 %v1495, 4
        %v1580 = vpop.permute.xlu0 %1579
        %1581 = vrot.lane.b32.xlu0 %v1498, 4
        %v1582 = vpop.permute.xlu0 %1581
        %vm1585 = vcmask 31744
        %v1586 = vsel %vm1585, %v1572, %v1580
        %v1587 = vsel %vm1585, %v1574, %v1582
        %v1589 = vsel %vm1013, %v1568, 0
        %1591 = vmatpush.msra.mxu0 0.0
        %1592 = vmatpush.msra.mxu0 0.0
        %1593 = vmatpush.msra.mxu0 0.0
        %1594 = vmatpush.msra.mxu0 0.0
        %1595 = vmatpush.msra.mxu0 0.0
        %1596 = vmatpush.msra.mxu0 0.0
        %1597 = vmatpush.msra.mxu0 0.0
        %1598 = vmatpush.msra.mxu0 0.0
        %1599 = vmatpush.msra.mxu0 0.0
        %1600 = vmatpush.msra.mxu0 0.0
        %1601 = vmatpush.msra.mxu0 0.0
        %1602 = vmatpush.msra.mxu0 0.0
        %1603 = vmatpush.msra.mxu0 0.0
        %1604 = vmatpush.msra.mxu0 0.0
        %1605 = vmatpush.msra.mxu0 %v1587
        %1606 = vmatpush.msra.mxu0 %v1586
        %1607 = vmatmul.f32.gmra.mxu0 %v1589
        %v1608 = vpop.f32.mrf.mxu0
        %v1609 = vadd.f32 0.0, %v1608
        %1610 = vdwg.mxu0
        %v1611 = vld [vmem:[%s511] sm:$0xff]
        %1613 = vset.pattern.permute.xlu0 0
        %1614 = vperm.xlu0 %1613, %v1611
        %v1615 = vpop.permute.xlu0 %1614
        %v1617 = vmul.f32 %v1609, %v1615
        %vm1618 = vcmask 64544
        %v1619 = vsel %vm1618, %v1617, -inf
        %1620 = vmax.xlane.f32.xlu0 %v1619
        %v1621 = vpop.xlane.xlu0 %1620
        %v1622 = vsub.f32 %v1617, %v1621
        %v1623 = vmul.f32 %v1622, 1.442695
        %v1624 = vpow.pop %v1623
        %1626 = vrot.lane.b32.xlu0 %v1624, 124
        %v1627 = vpop.permute.xlu0 %1626
        %v1629 = vsel %vm1585, %v1627, 0.0
        %1630 = vadd.xlane.f32.xlu0 %v1629
        %v1631 = vpop.xlane.xlu0 %1630
        %v1632 = vlog2.pop %v1631
        %v1633 = vmul.f32 %v1632, 0.6931472
        %v1634 = vadd.f32 %v1633, %v1621
        %v1635 = vsub.f32 0.0, %v1609
        %v1636 = vsub.f32 %v1617, %v1634
        %1638 = vrot.lane.b32.xlu0 %v1636, 124
        %v1639 = vpop.permute.xlu0 %1638
        %v1641 = vadd.f32 %v1635, %v1639
        %v1642 = vsel %vm1585, %v1641, -inf
        %1643 = vmax.xlane.f32.xlu0 %v1642
        %v1644 = vpop.xlane.xlu0 %1643
        %v1645 = vsub.f32 %v1641, %v1644
        %v1646 = vmul.f32 %v1645, 1.442695
        %v1647 = vpow.pop %v1646
        %v1648 = vsel %vm1585, %v1647, 0.0
        %1649 = vadd.xlane.f32.xlu0 %v1648
        %v1650 = vpop.xlane.xlu0 %1649
        %v1651 = vlog2.pop %v1650
        %v1652 = vmul.f32 %v1651, 0.6931472
        %v1653 = vadd.f32 %v1652, %v1644
        %vm1654 = vcmask 7168
        %v1655 = vsel %vm1654, %v1653, 0.0
        %1656 = vadd.xlane.f32.xlu0 %v1655
        %v1657 = vpop.xlane.xlu0 %1656
        %v1658 = vrot.slane %v1657, 4
        %v1659 = vadd.f32 %v1657, %v1658
        %v1660 = vrot.slane %v1659, 2
        %v1661 = vadd.f32 %v1659, %v1660
        %v1662 = vrot.slane %v1661, 1
        %v1663 = vadd.f32 %v1661, %v1662
        %s1664 = vtos %v1663
        %s1665 = smul.f32 %s1664, 0.5
        %s1666 = ssub.f32 0.0, %s1665
        %v1667 = vstv %s1666
        %v1668 = vadd.f32 %v1667, 0.0
        %1669 = vst [vmem:[%s479] sm:$0x1] %v1668
        %s1670 = sand.u32 %s300, 1
        %s1671 = scalar_lea.sflag [#allocation4], %s1670
        %s1672 = sand.u32 %s300, 1
        %s1673 = scalar_lea.vmem [#allocation5], %s1672
        // Predicated region
        $region69: #{tpu_custom_call.1} parent=63 // pred_check
          %p1674 = pneg %p310
        $region70: #{tpu_custom_call.1} parent=63 // pred_check_branch
          %1676 = sbr.rel (%p1674) target = $region72
        $region71: #{tpu_custom_call.1} parent=63 // pred_region
          %1678 = vsyncadd %s1671, 0
          %s1679 = scalar_lea.hbm %s11, %s26
          %s1681 = sshll.u32 %s1673, 4
          %s1682 = int_to_ptr.vmem [resolvable:$true] %s1681
          %s1683 = sshll.u32 %s1679, 4
          %s1684 = int_to_ptr.hbm [resolvable:$true] %s1683
          %1686 = dma.vmem_to_hbm [thread:$0]  %s1682, 16, %s1684, %s1671
        $region72: #{tpu_custom_call.1} parent=63 // pred_fallthru
          _
      $region64: #{tpu_custom_call.1} parent=5 // pred_fallthru
        _
      %p1687 = scmp.le.s32.totalorder 2, %s21
      // Predicated region
      $region73: #{tpu_custom_call.1} parent=5 // pred_check
        %p1688 = pneg %p1687
      $region74: #{tpu_custom_call.1} parent=5 // pred_check_branch
        %1690 = sbr.rel (%p1688) target = $region76
      $region75: #{tpu_custom_call.1} parent=5 // pred_region
        %s1691 = ssub.s32 %s21, 2
        // Predicated region
        $region77: #{tpu_custom_call.1} parent=75 // pred_check
          %p1692 = pneg %p316
        $region78: #{tpu_custom_call.1} parent=75 // pred_check_branch
          %1694 = sbr.rel (%p1692) target = $region80
        $region79: #{tpu_custom_call.1} parent=75 // pred_region
          %s1695 = sand.u32 %s301, 1
          %s1696 = scalar_lea.sflag [#allocation4], %s1695
          %s1697 = sand.u32 %s301, 1
          %s1698 = scalar_lea.vmem [#allocation5], %s1697
          %1700 = dma.done %s1696, 16
        $region80: #{tpu_custom_call.1} parent=75 // pred_fallthru
          _
      $region76: #{tpu_custom_call.1} parent=5 // pred_fallthru
        _
    $region6: #{tpu_custom_call.1} parent=1 // loop_footer
      %s25 = sadd.s32 1, %s21
    $region7: #{tpu_custom_call.1} parent=1 // loop_footer_branch
      %20 = sbr.rel target = $region3
    $region8: #{tpu_custom_call.1} parent=1 // loop_exit
      _
    %1701 = vsyncpa [#allocation3], 1
    %s1702 = scalar_lea.sflag [#allocation3], 1
    %1703 = vsyncpa %s1702, 1
    %1704 = vsyncpa [#allocation4], 1
    %s1705 = scalar_lea.sflag [#allocation4], 1
    %1706 = vsyncpa %s1705, 1

</llo_original>
